<compile_context>
chip_gen: v7x
topology: tpu7x:2x2x1
jax: 0.10.0
libtpu: 0.0.40
codegen_flags: <defaults>
</compile_context>

<pallas_src>
import functools
import math

import jax
import jax.numpy as jnp
from jax import lax
from jax.experimental import pallas as pl
from jax.experimental.pallas import tpu as pltpu

LN_EPS = 1e-5  # nn.LayerNorm default


def _round_up(x, m):
    return ((x + m - 1) // m) * m


def _vmem_capacity_bytes():
    """Per-TensorCore VMEM capacity; conservative 64 MiB (v7x) fallback if query fails."""
    try:
        cap = int(pltpu.get_tpu_info().vmem_capacity_bytes)
        if cap > 0:
            return cap
    except Exception:
        pass
    return 64 * 1024 * 1024


def _gelu(x, approximate):
    if approximate:
        # tanh approximation -> transcendental goes to the EUP (separate VLIW slot).
        return jax.nn.gelu(x, approximate=True)
    # nn.GELU() default is the exact (erf-based) GELU; kept for numerical parity.
    return 0.5 * x * (1.0 + lax.erf(x * (1.0 / math.sqrt(2.0))))


def _residual_mlp_kernel(x_ref, w1_ref, b1_ref, gamma_ref, beta_ref, w2_ref, b2_ref,
                         mask_ref, o_ref, *, hidden, need_mask, approx_gelu):
    # dropout: inference-mode identity.
    # TODO(synk): training-mode dropout (pltpu.prng_seed / prng_random_bits mask+scale) not implemented.

    # mlp_1: bf16 operands into the MXU, f32 accumulation.
    h = jnp.dot(x_ref[...], w1_ref[...], preferred_element_type=jnp.float32)
    h = h + b1_ref[...]                    # f32 bias add
    h = _gelu(h, approx_gelu)              # f32 elementwise

    # LayerNorm over the TRUE hidden dim. Padded hidden columns of h are exactly zero
    # (zero W1 columns, zero b1 entries, GELU(0)=0), so the row-sum is already correct;
    # only the centered values need masking before squaring (padded cols become -mu).
    inv_h = 1.0 / hidden
    mu = jnp.sum(h, axis=-1, keepdims=True) * inv_h
    hc = h - mu
    hc_valid = hc * mask_ref[...] if need_mask else hc   # 1 VALU op instead of iota/cmp/select
    var = jnp.sum(hc_valid * hc_valid, axis=-1, keepdims=True) * inv_h
    hn = hc * lax.rsqrt(var + LN_EPS)
    hn = hn * gamma_ref[...] + beta_ref[...]             # padded cols: gamma=beta=0 -> exactly 0

    # mlp_2: bf16 operands, f32 accumulation.
    y = jnp.dot(hn.astype(w2_ref.dtype), w2_ref[...], preferred_element_type=jnp.float32)
    y = y + b2_ref[...]
    o_ref[...] = y.astype(o_ref.dtype)


def prepare_params(params, *, compute_dtype=jnp.bfloat16):
    """One-time pad (feature dims to multiples of 128) + cast of the weights.

    Hoisted out of the forward path so steady-state calls do no HBM pad/cast passes.
    """
    w1, b1, gamma, beta, w2, b2 = (
        params["w1"], params["b1"], params["gamma"], params["beta"], params["w2"], params["b2"],
    )
    in_f, hid = w1.shape
    out_f = w2.shape[1]
    in_p, hid_p, out_p = _round_up(in_f, 128), _round_up(hid, 128), _round_up(out_f, 128)
    col = jnp.arange(hid_p)
    return {
        "w1": jnp.pad(w1, ((0, in_p - in_f), (0, hid_p - hid))).astype(compute_dtype),
        "b1": jnp.pad(b1, ((0, 0), (0, hid_p - hid))).astype(jnp.float32),
        "gamma": jnp.pad(gamma, ((0, 0), (0, hid_p - hid))).astype(jnp.float32),
        "beta": jnp.pad(beta, ((0, 0), (0, hid_p - hid))).astype(jnp.float32),
        "w2": jnp.pad(w2, ((0, hid_p - hid), (0, out_p - out_f))).astype(compute_dtype),
        "b2": jnp.pad(b2, ((0, 0), (0, out_p - out_f))).astype(jnp.float32),
        "mask": (col < hid).astype(jnp.float32).reshape(1, hid_p),
        "dims": (in_f, hid, out_f, in_p, hid_p, out_p),
        "compute_dtype": compute_dtype,
    }


def residual_mlp(x, prepared, *, tile_m=256, out_dtype=None, approx_gelu=False, x_buffers=2):
    """x: [rows, in_features]. prepared: output of prepare_params()."""
    in_f, hid, out_f, in_p, hid_p, out_p = prepared["dims"]
    compute_dtype = prepared["compute_dtype"]
    out_dtype = compute_dtype if out_dtype is None else out_dtype
    rows = x.shape[0]
    assert x.shape[1] == in_f, "input feature dim does not match prepared params"

    cd = jnp.dtype(compute_dtype).itemsize
    od = jnp.dtype(out_dtype).itemsize

    # Per-chip VMEM budget (headroom for compiler scratch / double buffers).
    vmem_cap = _vmem_capacity_bytes()
    budget = int(vmem_cap * 0.75)

    # Bytes that do not scale with tile_m: single-buffered resident weights + row vectors.
    resident_bytes = (in_p * hid_p + hid_p * out_p) * cd + 5 * hid_p * 4 + out_p * 4

    def footprint(tm):
        return (resident_bytes
                + x_buffers * tm * in_p * cd      # pipelined x tiles
                + 2 * tm * out_p * od             # double-buffered out tiles
                + 3 * tm * hid_p * 4)             # live f32 intermediates (h / hc / hn)

    # tile_m: multiple of 16 (bf16 sublane packing); shrink until it fits the VMEM budget.
    tile_m = max(16, _round_up(min(tile_m, _round_up(rows, 16)), 16))
    while tile_m > 16 and footprint(tile_m) > budget:
        tile_m = max(16, _round_up(tile_m // 2, 16))
    # TODO(synk): if the resident weights alone exceed the budget (very large hidden on v7x),
    # add a hidden-axis "arbitrary" grid dimension (W1 col blocks / W2 row blocks) instead of
    # only shrinking tile_m.

    rows_p = _round_up(rows, tile_m)
    xp = x.astype(compute_dtype) if x.dtype != compute_dtype else x
    if rows_p != rows or in_p != in_f:
        xp = jnp.pad(xp, ((0, rows_p - rows), (0, in_p - in_f)))

    vmem_limit = int(min(max(2 * footprint(tile_m), 32 * 1024 * 1024), int(vmem_cap * 0.85)))

    grid = (rows_p // tile_m,)
    kernel = functools.partial(_residual_mlp_kernel, hidden=hid,
                               need_mask=(hid_p != hid), approx_gelu=approx_gelu)

    w1p, b1p, gp, btp, w2p, b2p, mask = (
        prepared["w1"], prepared["b1"], prepared["gamma"], prepared["beta"],
        prepared["w2"], prepared["b2"], prepared["mask"],
    )

    def build(use_pipeline_mode):
        if use_pipeline_mode:
            def res_spec(a):
                return pl.BlockSpec(a.shape, lambda i: (0, 0), pipeline_mode=pl.Buffered(1))
            x_spec = pl.BlockSpec((tile_m, in_p), lambda i: (i, 0),
                                  pipeline_mode=pl.Buffered(max(2, x_buffers)))
        else:
            def res_spec(a):
                return pl.BlockSpec(a.shape, lambda i: (0, 0))
            x_spec = pl.BlockSpec((tile_m, in_p), lambda i: (i, 0))
        return pl.pallas_call(
            kernel,
            out_shape=jax.ShapeDtypeStruct((rows_p, out_p), out_dtype),
            grid_spec=pl.GridSpec(
                grid=grid,
                in_specs=[
                    x_spec,             # x tile, pipelined over row tiles
                    res_spec(w1p),      # W1    [in_p, hid_p]   (VMEM-resident, single-buffered)
                    res_spec(b1p),      # b1    [1, hid_p]
                    res_spec(gp),       # gamma [1, hid_p]
                    res_spec(btp),      # beta  [1, hid_p]
                    res_spec(w2p),      # W2    [hid_p, out_p]
                    res_spec(b2p),      # b2    [1, out_p]
                    res_spec(mask),     # valid-hidden mask [1, hid_p]
                ],
                out_specs=pl.BlockSpec((tile_m, out_p), lambda i: (i, 0)),
            ),
            compiler_params=pltpu.CompilerParams(
                dimension_semantics=("parallel",),   # independent row tiles -> megacore on v7x
                vmem_limit_bytes=vmem_limit,
            ),
        )

    try:
        y_pad = build(True)(xp, w1p, b1p, gp, btp, w2p, b2p, mask)
    except Exception:
        # Fallback for JAX builds without BlockSpec pipeline_mode support.
        y_pad = build(False)(xp, w1p, b1p, gp, btp, w2p, b2p, mask)

    return y_pad[:rows, :out_f]


def init_params(key, in_features, hidden_features, out_features):
    """Deterministic init mimicking nn.Linear (uniform +/- 1/sqrt(fan_in)) and nn.LayerNorm."""
    k1, k2, k3, k4 = jax.random.split(key, 4)
    bound1 = 1.0 / math.sqrt(in_features)
    bound2 = 1.0 / math.sqrt(hidden_features)
    # Stored pre-transposed: W1 [in, hidden], W2 [hidden, out].
    w1 = jax.random.uniform(k1, (in_features, hidden_features), jnp.float32, -bound1, bound1)
    b1 = jax.random.uniform(k2, (1, hidden_features), jnp.float32, -bound1, bound1)
    w2 = jax.random.uniform(k3, (hidden_features, out_features), jnp.float32, -bound2, bound2)
    b2 = jax.random.uniform(k4, (1, out_features), jnp.float32, -bound2, bound2)
    gamma = jnp.ones((1, hidden_features), jnp.float32)
    beta = jnp.zeros((1, hidden_features), jnp.float32)
    return {"w1": w1, "b1": b1, "gamma": gamma, "beta": beta, "w2": w2, "b2": b2}


def reference(x, p, *, bf16_matmul=False):
    """Pure-JAX reference. bf16_matmul=True mirrors the kernel's MXU operand precision."""
    if bf16_matmul:
        xm, w1, w2 = x.astype(jnp.bfloat16), p["w1"].astype(jnp.bfloat16), p["w2"].astype(jnp.bfloat16)
    else:
        xm, w1, w2 = x, p["w1"], p["w2"]
    h = jnp.dot(xm, w1, preferred_element_type=jnp.float32) + p["b1"]
    h = 0.5 * h * (1.0 + lax.erf(h / math.sqrt(2.0)))
    mu = jnp.mean(h, axis=-1, keepdims=True)
    var = jnp.mean((h - mu) ** 2, axis=-1, keepdims=True)
    hn = (h - mu) * lax.rsqrt(var + LN_EPS) * p["gamma"] + p["beta"]
    if bf16_matmul:
        hn = hn.astype(jnp.bfloat16)
    return jnp.dot(hn, w2, preferred_element_type=jnp.float32) + p["b2"]


if __name__ == "__main__":
    # Small shapes: batch=2, seq=128 -> rows=256; in=32, hidden=64, out=32.
    batch, seq = 2, 128
    in_features, hidden_features, out_features = 32, 64, 32

    key = jax.random.PRNGKey(0)
    kx, kp = jax.random.split(key)
    x = jax.random.normal(kx, (batch, seq, in_features), jnp.float32)
    params = init_params(kp, in_features, hidden_features, out_features)

    # One-time weight preparation (pad + bf16 cast), reused across forward calls.
    prepared = prepare_params(params, compute_dtype=jnp.bfloat16)

    x2d = x.reshape(batch * seq, in_features)  # layout: [rows, features]
    # tile_m=128 at this tiny size just to exercise a multi-tile grid; default is 256.
    out = residual_mlp(x2d, prepared, tile_m=128)
    out = jax.block_until_ready(out)

    assert out.shape == (batch * seq, out_features)
    out_f32 = out.astype(jnp.float32)

    # Check vs a reference using the same bf16-MXU / f32-accumulate precision
    # (tolerance covers the bf16 output rounding).
    ref_bf16 = reference(x2d, params, bf16_matmul=True)
    assert jnp.allclose(out_f32, ref_bf16, atol=1.5e-2, rtol=1.5e-2), "mismatch vs bf16-matmul reference"

    # Loose sanity check vs the full-f32 reference (bf16 operand/output rounding is the only drift).
    ref_f32 = reference(x2d, params, bf16_matmul=False)
    assert jnp.allclose(out_f32, ref_f32, atol=1e-1, rtol=1e-1), "excessive drift vs f32 reference"

    # reshape back to [batch, seq, out_features] like the PyTorch module would produce
    _ = out.reshape(batch, seq, out_features)
    print("KERNEL_OK")
</pallas_src>

<mosaic_0001>
module attributes {stable_mosaic.version = 11 : i64} {
  func.func @_residual_mlp_kernel(%arg0: i32, %arg1: memref<128x128xbf16, #tpu.memory_space<vmem>>, %arg2: memref<128x128xbf16, #tpu.memory_space<vmem>>, %arg3: memref<1x128xf32, #tpu.memory_space<vmem>>, %arg4: memref<1x128xf32, #tpu.memory_space<vmem>>, %arg5: memref<1x128xf32, #tpu.memory_space<vmem>>, %arg6: memref<128x128xbf16, #tpu.memory_space<vmem>>, %arg7: memref<1x128xf32, #tpu.memory_space<vmem>>, %arg8: memref<1x128xf32, #tpu.memory_space<vmem>>, %arg9: memref<128x128xbf16, #tpu.memory_space<vmem>>) attributes {dimension_semantics = [#tpu.dimension_semantics<parallel>], iteration_bounds = array<i64: 2>, scalar_prefetch = 0 : i64, scratch_operands = 0 : i64, tpu.core_type = #tpu.core_type<tc>, window_params = [{pipeline_mode = #tpu.pipeline_mode<double_buffered>, transform_indices = @transform_0, window_bounds = array<i64: 128, 128>}, {pipeline_mode = #tpu.pipeline_mode<synchronous>, transform_indices = @transform_1, window_bounds = array<i64: 128, 128>}, {pipeline_mode = #tpu.pipeline_mode<synchronous>, transform_indices = @transform_2, window_bounds = array<i64: 1, 128>}, {pipeline_mode = #tpu.pipeline_mode<synchronous>, transform_indices = @transform_3, window_bounds = array<i64: 1, 128>}, {pipeline_mode = #tpu.pipeline_mode<synchronous>, transform_indices = @transform_4, window_bounds = array<i64: 1, 128>}, {pipeline_mode = #tpu.pipeline_mode<synchronous>, transform_indices = @transform_5, window_bounds = array<i64: 128, 128>}, {pipeline_mode = #tpu.pipeline_mode<synchronous>, transform_indices = @transform_6, window_bounds = array<i64: 1, 128>}, {pipeline_mode = #tpu.pipeline_mode<synchronous>, transform_indices = @transform_7, window_bounds = array<i64: 1, 128>}, {transform_indices = @transform_8, window_bounds = array<i64: 128, 128>}]} {
    %c0 = arith.constant 0 : index
    %c0_0 = arith.constant 0 : index
    %0 = vector.load %arg1[%c0, %c0_0] : memref<128x128xbf16, #tpu.memory_space<vmem>>, vector<128x128xbf16>
    %c0_1 = arith.constant 0 : index
    %c0_2 = arith.constant 0 : index
    %1 = vector.load %arg2[%c0_1, %c0_2] : memref<128x128xbf16, #tpu.memory_space<vmem>>, vector<128x128xbf16>
    %cst = arith.constant dense<0.000000e+00> : vector<128x128xf32>
    %2 = tpu.matmul %0, %1, %cst {dimension_numbers = #tpu.dot_dimension_numbers<[1], [0], [0], [1], [0, 0, 1, 1], [], []>} : vector<128x128xbf16>, vector<128x128xbf16>, vector<128x128xf32> -> vector<128x128xf32>
    %c0_3 = arith.constant 0 : index
    %c0_4 = arith.constant 0 : index
    %3 = vector.load %arg3[%c0_3, %c0_4] : memref<1x128xf32, #tpu.memory_space<vmem>>, vector<1x128xf32>
    %4 = vector.broadcast %3 : vector<1x128xf32> to vector<128x128xf32>
    %5 = arith.addf %2, %4 : vector<128x128xf32>
    %cst_5 = arith.constant 5.000000e-01 : f32
    %6 = vector.broadcast %cst_5 : f32 to vector<128x128xf32>
    %7 = arith.mulf %6, %5 : vector<128x128xf32>
    %cst_6 = arith.constant 0.707106769 : f32
    %8 = vector.broadcast %cst_6 : f32 to vector<128x128xf32>
    %9 = arith.mulf %5, %8 : vector<128x128xf32>
    %10 = math.erf %9 : vector<128x128xf32>
    %cst_7 = arith.constant 1.000000e+00 : f32
    %11 = vector.broadcast %cst_7 : f32 to vector<128x128xf32>
    %12 = arith.addf %11, %10 : vector<128x128xf32>
    %13 = arith.mulf %7, %12 : vector<128x128xf32>
    %cst_8 = arith.constant dense<0.000000e+00> : vector<128xf32>
    %14 = vector.multi_reduction <add>, %13, %cst_8 [1] : vector<128x128xf32> to vector<128xf32>
    %15 = vector.shape_cast %14 : vector<128xf32> to vector<128x1xf32>
    %cst_9 = arith.constant 1.562500e-02 : f32
    %16 = vector.broadcast %cst_9 : f32 to vector<128x1xf32>
    %17 = arith.mulf %15, %16 : vector<128x1xf32>
    %18 = vector.broadcast %17 : vector<128x1xf32> to vector<128x128xf32>
    %19 = arith.subf %13, %18 : vector<128x128xf32>
    %c0_10 = arith.constant 0 : index
    %c0_11 = arith.constant 0 : index
    %20 = vector.load %arg8[%c0_10, %c0_11] : memref<1x128xf32, #tpu.memory_space<vmem>>, vector<1x128xf32>
    %21 = vector.broadcast %20 : vector<1x128xf32> to vector<128x128xf32>
    %22 = arith.mulf %19, %21 : vector<128x128xf32>
    %23 = arith.mulf %22, %22 : vector<128x128xf32>
    %cst_12 = arith.constant dense<0.000000e+00> : vector<128xf32>
    %24 = vector.multi_reduction <add>, %23, %cst_12 [1] : vector<128x128xf32> to vector<128xf32>
    %25 = vector.shape_cast %24 : vector<128xf32> to vector<128x1xf32>
    %cst_13 = arith.constant 1.562500e-02 : f32
    %26 = vector.broadcast %cst_13 : f32 to vector<128x1xf32>
    %27 = arith.mulf %25, %26 : vector<128x1xf32>
    %cst_14 = arith.constant 9.99999974E-6 : f32
    %28 = vector.broadcast %cst_14 : f32 to vector<128x1xf32>
    %29 = arith.addf %27, %28 : vector<128x1xf32>
    %30 = math.rsqrt %29 : vector<128x1xf32>
    %31 = vector.broadcast %30 : vector<128x1xf32> to vector<128x128xf32>
    %32 = arith.mulf %19, %31 : vector<128x128xf32>
    %c0_15 = arith.constant 0 : index
    %c0_16 = arith.constant 0 : index
    %33 = vector.load %arg4[%c0_15, %c0_16] : memref<1x128xf32, #tpu.memory_space<vmem>>, vector<1x128xf32>
    %34 = vector.broadcast %33 : vector<1x128xf32> to vector<128x128xf32>
    %35 = arith.mulf %32, %34 : vector<128x128xf32>
    %c0_17 = arith.constant 0 : index
    %c0_18 = arith.constant 0 : index
    %36 = vector.load %arg5[%c0_17, %c0_18] : memref<1x128xf32, #tpu.memory_space<vmem>>, vector<1x128xf32>
    %37 = vector.broadcast %36 : vector<1x128xf32> to vector<128x128xf32>
    %38 = arith.addf %35, %37 : vector<128x128xf32>
    %39 = arith.truncf %38 : vector<128x128xf32> to vector<128x128xbf16>
    %c0_19 = arith.constant 0 : index
    %c0_20 = arith.constant 0 : index
    %40 = vector.load %arg6[%c0_19, %c0_20] : memref<128x128xbf16, #tpu.memory_space<vmem>>, vector<128x128xbf16>
    %cst_21 = arith.constant dense<0.000000e+00> : vector<128x128xf32>
    %41 = tpu.matmul %39, %40, %cst_21 {dimension_numbers = #tpu.dot_dimension_numbers<[1], [0], [0], [1], [0, 0, 1, 1], [], []>} : vector<128x128xbf16>, vector<128x128xbf16>, vector<128x128xf32> -> vector<128x128xf32>
    %c0_22 = arith.constant 0 : index
    %c0_23 = arith.constant 0 : index
    %42 = vector.load %arg7[%c0_22, %c0_23] : memref<1x128xf32, #tpu.memory_space<vmem>>, vector<1x128xf32>
    %43 = vector.broadcast %42 : vector<1x128xf32> to vector<128x128xf32>
    %44 = arith.addf %41, %43 : vector<128x128xf32>
    %45 = arith.truncf %44 : vector<128x128xf32> to vector<128x128xbf16>
    %c0_24 = arith.constant 0 : index
    %c0_25 = arith.constant 0 : index
    %46 = vector.load %arg9[%c0_24, %c0_25] : memref<128x128xbf16, #tpu.memory_space<vmem>>, vector<128x128xbf16>
    tpu.vector_store %arg9[%c0_24, %c0_25], %45 {strides = array<i32>} : memref<128x128xbf16, #tpu.memory_space<vmem>>, vector<128x128xbf16>,
    return
  }
  func.func @transform_0(%arg0: i32) -> (i32, i32) {
    %c0_i32 = arith.constant 0 : i32
    %c0_i32_0 = arith.constant 0 : i32
    return %arg0, %c0_i32 : i32, i32
  }
  func.func @transform_1(%arg0: i32) -> (i32, i32) {
    %c0_i32 = arith.constant 0 : i32
    %c0_i32_0 = arith.constant 0 : i32
    %c0_i32_1 = arith.constant 0 : i32
    return %c0_i32, %c0_i32_0 : i32, i32
  }
  func.func @transform_2(%arg0: i32) -> (i32, i32) {
    %c0_i32 = arith.constant 0 : i32
    %c0_i32_0 = arith.constant 0 : i32
    %c0_i32_1 = arith.constant 0 : i32
    return %c0_i32, %c0_i32_0 : i32, i32
  }
  func.func @transform_3(%arg0: i32) -> (i32, i32) {
    %c0_i32 = arith.constant 0 : i32
    %c0_i32_0 = arith.constant 0 : i32
    %c0_i32_1 = arith.constant 0 : i32
    return %c0_i32, %c0_i32_0 : i32, i32
  }
  func.func @transform_4(%arg0: i32) -> (i32, i32) {
    %c0_i32 = arith.constant 0 : i32
    %c0_i32_0 = arith.constant 0 : i32
    %c0_i32_1 = arith.constant 0 : i32
    return %c0_i32, %c0_i32_0 : i32, i32
  }
  func.func @transform_5(%arg0: i32) -> (i32, i32) {
    %c0_i32 = arith.constant 0 : i32
    %c0_i32_0 = arith.constant 0 : i32
    %c0_i32_1 = arith.constant 0 : i32
    return %c0_i32, %c0_i32_0 : i32, i32
  }
  func.func @transform_6(%arg0: i32) -> (i32, i32) {
    %c0_i32 = arith.constant 0 : i32
    %c0_i32_0 = arith.constant 0 : i32
    %c0_i32_1 = arith.constant 0 : i32
    return %c0_i32, %c0_i32_0 : i32, i32
  }
  func.func @transform_7(%arg0: i32) -> (i32, i32) {
    %c0_i32 = arith.constant 0 : i32
    %c0_i32_0 = arith.constant 0 : i32
    %c0_i32_1 = arith.constant 0 : i32
    return %c0_i32, %c0_i32_0 : i32, i32
  }
  func.func @transform_8(%arg0: i32) -> (i32, i32) {
    %c0_i32 = arith.constant 0 : i32
    %c0_i32_0 = arith.constant 0 : i32
    return %arg0, %c0_i32 : i32, i32
  }
}

module attributes {stable_mosaic.version = 11 : i64} {
  func.func @_residual_mlp_kernel(%arg0: i32, %arg1: memref<128x128xbf16, #tpu.memory_space<vmem>>, %arg2: memref<128x128xbf16, #tpu.memory_space<vmem>>, %arg3: memref<1x128xf32, #tpu.memory_space<vmem>>, %arg4: memref<1x128xf32, #tpu.memory_space<vmem>>, %arg5: memref<1x128xf32, #tpu.memory_space<vmem>>, %arg6: memref<128x128xbf16, #tpu.memory_space<vmem>>, %arg7: memref<1x128xf32, #tpu.memory_space<vmem>>, %arg8: memref<1x128xf32, #tpu.memory_space<vmem>>, %arg9: memref<128x128xbf16, #tpu.memory_space<vmem>>) attributes {dimension_semantics = [#tpu.dimension_semantics<parallel>], iteration_bounds = array<i64: 2>, scalar_prefetch = 0 : i64, scratch_operands = 0 : i64, tpu.core_type = #tpu.core_type<tc>, window_params = [{transform_indices = @transform_0, window_bounds = array<i64: 128, 128>}, {pipeline_mode = #tpu.pipeline_mode<synchronous>, transform_indices = @transform_1, window_bounds = array<i64: 128, 128>}, {pipeline_mode = #tpu.pipeline_mode<synchronous>, transform_indices = @transform_2, window_bounds = array<i64: 1, 128>}, {pipeline_mode = #tpu.pipeline_mode<synchronous>, transform_indices = @transform_3, window_bounds = array<i64: 1, 128>}, {pipeline_mode = #tpu.pipeline_mode<synchronous>, transform_indices = @transform_4, window_bounds = array<i64: 1, 128>}, {pipeline_mode = #tpu.pipeline_mode<synchronous>, transform_indices = @transform_5, window_bounds = array<i64: 128, 128>}, {pipeline_mode = #tpu.pipeline_mode<synchronous>, transform_indices = @transform_6, window_bounds = array<i64: 1, 128>}, {pipeline_mode = #tpu.pipeline_mode<synchronous>, transform_indices = @transform_7, window_bounds = array<i64: 1, 128>}, {transform_indices = @transform_8, window_bounds = array<i64: 128, 128>}]} {
    %c0 = arith.constant 0 : index
    %c0_0 = arith.constant 0 : index
    %0 = vector.load %arg1[%c0, %c0_0] : memref<128x128xbf16, #tpu.memory_space<vmem>>, vector<128x128xbf16>
    %c0_1 = arith.constant 0 : index
    %c0_2 = arith.constant 0 : index
    %1 = vector.load %arg2[%c0_1, %c0_2] : memref<128x128xbf16, #tpu.memory_space<vmem>>, vector<128x128xbf16>
    %cst = arith.constant dense<0.000000e+00> : vector<128x128xf32>
    %2 = tpu.matmul %0, %1, %cst {dimension_numbers = #tpu.dot_dimension_numbers<[1], [0], [0], [1], [0, 0, 1, 1], [], []>} : vector<128x128xbf16>, vector<128x128xbf16>, vector<128x128xf32> -> vector<128x128xf32>
    %c0_3 = arith.constant 0 : index
    %c0_4 = arith.constant 0 : index
    %3 = vector.load %arg3[%c0_3, %c0_4] : memref<1x128xf32, #tpu.memory_space<vmem>>, vector<1x128xf32>
    %4 = vector.broadcast %3 : vector<1x128xf32> to vector<128x128xf32>
    %5 = arith.addf %2, %4 : vector<128x128xf32>
    %cst_5 = arith.constant 5.000000e-01 : f32
    %6 = vector.broadcast %cst_5 : f32 to vector<128x128xf32>
    %7 = arith.mulf %6, %5 : vector<128x128xf32>
    %cst_6 = arith.constant 0.707106769 : f32
    %8 = vector.broadcast %cst_6 : f32 to vector<128x128xf32>
    %9 = arith.mulf %5, %8 : vector<128x128xf32>
    %10 = math.erf %9 : vector<128x128xf32>
    %cst_7 = arith.constant 1.000000e+00 : f32
    %11 = vector.broadcast %cst_7 : f32 to vector<128x128xf32>
    %12 = arith.addf %11, %10 : vector<128x128xf32>
    %13 = arith.mulf %7, %12 : vector<128x128xf32>
    %cst_8 = arith.constant dense<0.000000e+00> : vector<128xf32>
    %14 = vector.multi_reduction <add>, %13, %cst_8 [1] : vector<128x128xf32> to vector<128xf32>
    %15 = vector.shape_cast %14 : vector<128xf32> to vector<128x1xf32>
    %cst_9 = arith.constant 1.562500e-02 : f32
    %16 = vector.broadcast %cst_9 : f32 to vector<128x1xf32>
    %17 = arith.mulf %15, %16 : vector<128x1xf32>
    %18 = vector.broadcast %17 : vector<128x1xf32> to vector<128x128xf32>
    %19 = arith.subf %13, %18 : vector<128x128xf32>
    %c0_10 = arith.constant 0 : index
    %c0_11 = arith.constant 0 : index
    %20 = vector.load %arg8[%c0_10, %c0_11] : memref<1x128xf32, #tpu.memory_space<vmem>>, vector<1x128xf32>
    %21 = vector.broadcast %20 : vector<1x128xf32> to vector<128x128xf32>
    %22 = arith.mulf %19, %21 : vector<128x128xf32>
    %23 = arith.mulf %22, %22 : vector<128x128xf32>
    %cst_12 = arith.constant dense<0.000000e+00> : vector<128xf32>
    %24 = vector.multi_reduction <add>, %23, %cst_12 [1] : vector<128x128xf32> to vector<128xf32>
    %25 = vector.shape_cast %24 : vector<128xf32> to vector<128x1xf32>
    %cst_13 = arith.constant 1.562500e-02 : f32
    %26 = vector.broadcast %cst_13 : f32 to vector<128x1xf32>
    %27 = arith.mulf %25, %26 : vector<128x1xf32>
    %cst_14 = arith.constant 9.99999974E-6 : f32
    %28 = vector.broadcast %cst_14 : f32 to vector<128x1xf32>
    %29 = arith.addf %27, %28 : vector<128x1xf32>
    %30 = math.rsqrt %29 : vector<128x1xf32>
    %31 = vector.broadcast %30 : vector<128x1xf32> to vector<128x128xf32>
    %32 = arith.mulf %19, %31 : vector<128x128xf32>
    %c0_15 = arith.constant 0 : index
    %c0_16 = arith.constant 0 : index
    %33 = vector.load %arg4[%c0_15, %c0_16] : memref<1x128xf32, #tpu.memory_space<vmem>>, vector<1x128xf32>
    %34 = vector.broadcast %33 : vector<1x128xf32> to vector<128x128xf32>
    %35 = arith.mulf %32, %34 : vector<128x128xf32>
    %c0_17 = arith.constant 0 : index
    %c0_18 = arith.constant 0 : index
    %36 = vector.load %arg5[%c0_17, %c0_18] : memref<1x128xf32, #tpu.memory_space<vmem>>, vector<1x128xf32>
    %37 = vector.broadcast %36 : vector<1x128xf32> to vector<128x128xf32>
    %38 = arith.addf %35, %37 : vector<128x128xf32>
    %39 = arith.truncf %38 : vector<128x128xf32> to vector<128x128xbf16>
    %c0_19 = arith.constant 0 : index
    %c0_20 = arith.constant 0 : index
    %40 = vector.load %arg6[%c0_19, %c0_20] : memref<128x128xbf16, #tpu.memory_space<vmem>>, vector<128x128xbf16>
    %cst_21 = arith.constant dense<0.000000e+00> : vector<128x128xf32>
    %41 = tpu.matmul %39, %40, %cst_21 {dimension_numbers = #tpu.dot_dimension_numbers<[1], [0], [0], [1], [0, 0, 1, 1], [], []>} : vector<128x128xbf16>, vector<128x128xbf16>, vector<128x128xf32> -> vector<128x128xf32>
    %c0_22 = arith.constant 0 : index
    %c0_23 = arith.constant 0 : index
    %42 = vector.load %arg7[%c0_22, %c0_23] : memref<1x128xf32, #tpu.memory_space<vmem>>, vector<1x128xf32>
    %43 = vector.broadcast %42 : vector<1x128xf32> to vector<128x128xf32>
    %44 = arith.addf %41, %43 : vector<128x128xf32>
    %45 = arith.truncf %44 : vector<128x128xf32> to vector<128x128xbf16>
    %c0_24 = arith.constant 0 : index
    %c0_25 = arith.constant 0 : index
    %46 = vector.load %arg9[%c0_24, %c0_25] : memref<128x128xbf16, #tpu.memory_space<vmem>>, vector<128x128xbf16>
    tpu.vector_store %arg9[%c0_24, %c0_25], %45 {strides = array<i32>} : memref<128x128xbf16, #tpu.memory_space<vmem>>, vector<128x128xbf16>,
    return
  }
  func.func @transform_0(%arg0: i32) -> (i32, i32) {
    %c0_i32 = arith.constant 0 : i32
    %c0_i32_0 = arith.constant 0 : i32
    return %arg0, %c0_i32 : i32, i32
  }
  func.func @transform_1(%arg0: i32) -> (i32, i32) {
    %c0_i32 = arith.constant 0 : i32
    %c0_i32_0 = arith.constant 0 : i32
    %c0_i32_1 = arith.constant 0 : i32
    return %c0_i32, %c0_i32_0 : i32, i32
  }
  func.func @transform_2(%arg0: i32) -> (i32, i32) {
    %c0_i32 = arith.constant 0 : i32
    %c0_i32_0 = arith.constant 0 : i32
    %c0_i32_1 = arith.constant 0 : i32
    return %c0_i32, %c0_i32_0 : i32, i32
  }
  func.func @transform_3(%arg0: i32) -> (i32, i32) {
    %c0_i32 = arith.constant 0 : i32
    %c0_i32_0 = arith.constant 0 : i32
    %c0_i32_1 = arith.constant 0 : i32
    return %c0_i32, %c0_i32_0 : i32, i32
  }
  func.func @transform_4(%arg0: i32) -> (i32, i32) {
    %c0_i32 = arith.constant 0 : i32
    %c0_i32_0 = arith.constant 0 : i32
    %c0_i32_1 = arith.constant 0 : i32
    return %c0_i32, %c0_i32_0 : i32, i32
  }
  func.func @transform_5(%arg0: i32) -> (i32, i32) {
    %c0_i32 = arith.constant 0 : i32
    %c0_i32_0 = arith.constant 0 : i32
    %c0_i32_1 = arith.constant 0 : i32
    return %c0_i32, %c0_i32_0 : i32, i32
  }
  func.func @transform_6(%arg0: i32) -> (i32, i32) {
    %c0_i32 = arith.constant 0 : i32
    %c0_i32_0 = arith.constant 0 : i32
    %c0_i32_1 = arith.constant 0 : i32
    return %c0_i32, %c0_i32_0 : i32, i32
  }
  func.func @transform_7(%arg0: i32) -> (i32, i32) {
    %c0_i32 = arith.constant 0 : i32
    %c0_i32_0 = arith.constant 0 : i32
    %c0_i32_1 = arith.constant 0 : i32
    return %c0_i32, %c0_i32_0 : i32, i32
  }
  func.func @transform_8(%arg0: i32) -> (i32, i32) {
    %c0_i32 = arith.constant 0 : i32
    %c0_i32_0 = arith.constant 0 : i32
    return %arg0, %c0_i32 : i32, i32
  }
}

</mosaic_0001>

<llo_original>
// kernel: tpu_custom_call.1
$region0: #{tpu_custom_call.1}
  #allocation0 [shape = 'u32[]', space=smem, size = 0x4, offset = 0x4, fixed_abs, tag = 'smem constant byte address 0x4 - core index']
  #allocation1 [shape = 'u32[144,128]{1,0:T(1,128)}', space=vmem, size = 0x12000, scoped, tag = 'internal scratch']
  %s0 = inlined_call_operand.hbm [shape: bf16[256,128], index: 0, kind: input, shape index: {}]
  %s1 = inlined_call_operand.hbm [shape: bf16[128,128], index: 1, kind: input, shape index: {}]
  %s2 = inlined_call_operand.vmem [shape: f32[1,128], index: 2, kind: input, shape index: {}]
  %s3 = inlined_call_operand.vmem [shape: f32[1,128], index: 3, kind: input, shape index: {}]
  %s4 = inlined_call_operand.vmem [shape: f32[1,128], index: 4, kind: input, shape index: {}]
  %s5 = inlined_call_operand.hbm [shape: bf16[128,128], index: 5, kind: input, shape index: {}]
  %s6 = inlined_call_operand.vmem [shape: f32[1,128], index: 6, kind: input, shape index: {}]
  %s7 = inlined_call_operand.vmem [shape: f32[1,128], index: 7, kind: input, shape index: {}]
  %s8 = inlined_call_operand.hbm [shape: bf16[256,128], index: 8, kind: output, shape index: {}]
  %s9 = sld [smem:[#allocation0]]
  $region77: #{tpu_custom_call.1} parent=0
    _
  %s11 = ssub.s32 1, %s9
  %s12 = scalar_select 0, %s11, %s9
  $region1: #{tpu_custom_call.1} parent=0
    #allocation2 [shape = 'u8[65536]{0}', space=vmem, size = 0x10000, scoped, tag = 'input window, operand 0']
    #allocation3 [shape = 's32[2]{0}', space=sflag, size = 0x8, scoped, tag = 'scoped memory for tpu_custom_call.1']
    #allocation4 [shape = 's32[2]{0}', space=sflag, size = 0x8, scoped, tag = 'scoped memory for tpu_custom_call.1']
    #allocation5 [shape = 'u8[32768]{0}', space=vmem, size = 0x8000, scoped, tag = 'input window, operand 1, single buffered']
    #allocation6 [shape = 's32[1]{0}', space=sflag, size = 0x4, scoped, tag = 'scoped memory for tpu_custom_call.1']
    #allocation7 [shape = 'u8[32768]{0}', space=vmem, size = 0x8000, scoped, tag = 'input window, operand 5, single buffered']
    #allocation8 [shape = 'u8[65536]{0}', space=vmem, size = 0x10000, scoped, tag = 'output window, operand 0']
    %13 = vsyncpa [#allocation3], 0
    %s14 = scalar_lea.sflag [#allocation3], 1
    %15 = vsyncpa %s14, 0
    %16 = vsyncpa [#allocation6], 0
    %17 = vsyncpa [#allocation4], 0
    %s18 = scalar_lea.sflag [#allocation4], 1
    %19 = vsyncpa %s18, 0
    loop: start=0, step=1, limit=4
    $region2: #{tpu_custom_call.1} parent=1 // loop_pre_header
      _
    $region3: #{tpu_custom_call.1} parent=1 // loop_header
      %s21 = sphi 0, %s25
      %p22 = scmp.ge.s32.totalorder %s21, 4
      %s31 = sphi 0, %s33
      %s34 = sphi 0, %s31
      %s35 = sphi 0, %s34
      %s51 = sphi 0, %s35
      %s55 = sphi 0, %s55
      %s57 = sphi 0, %s55
      %s58 = sphi 0, %s57
      %s72 = sphi 0, %s58
      %s76 = sphi 0, %s76
      %s78 = sphi 0, %s76
      %s79 = sphi 0, %s78
      %s93 = sphi 0, %s79
      %s97 = sphi 0, %s97
      %s99 = sphi 0, %s97
      %s100 = sphi 0, %s99
      %s114 = sphi 0, %s100
      %s118 = sphi 0, %s118
      %s120 = sphi 0, %s118
      %s121 = sphi 0, %s120
      %s135 = sphi 0, %s121
      %s139 = sphi 0, %s139
      %s141 = sphi 0, %s139
      %s142 = sphi 0, %s141
      %s156 = sphi 0, %s142
      %s160 = sphi 0, %s160
      %s162 = sphi 0, %s160
      %s163 = sphi 0, %s162
      %s177 = sphi 0, %s163
      %s181 = sphi 0, %s181
      %s183 = sphi 0, %s181
      %s184 = sphi 0, %s183
      %s198 = sphi 0, %s184
      %s204 = sphi 0, %s206
      %s207 = sphi 0, %s204
      %s208 = sphi 0, %s207
      %s224 = sphi 0, %s208
    $region4: #{tpu_custom_call.1} parent=1 // loop_header_branch
      %24 = sbr.rel (%p22) target = $region8
    $region5: #{tpu_custom_call.1} parent=1 // loop_body
      %s26 = ssub.s32 %s21, 1
      %s27 = ssub.s32 %s21, 2
      %s28 = sadd.s32 %s21, 1
      %s29 = ssub.s32 %s21, %s28
      %p30 = scmp.eq.s32.totalorder %s29, 0
      %s32 = sadd.s32 %s31, 1
      %s33 = scalar_select %p30, %s31, %s32
      %p36 = pneg %p30
      %p37 = scmp.eq.s32.totalorder %s21, 1
      %p38 = por %p36, %p37
      %p39 = scmp.ne.s32.totalorder %s31, %s34
      %p40 = scmp.eq.s32.totalorder %s21, 0
      %p41 = por %p39, %p40
      %p42 = scmp.ne.s32.totalorder %s31, %s34
      %p43 = scmp.eq.s32.totalorder %s26, 1
      %p44 = por %p42, %p43
      %p45 = scmp.ne.s32.totalorder %s34, %s35
      %p46 = scmp.eq.s32.totalorder %s26, 0
      %p47 = por %p45, %p46
      %p48 = scmp.ne.s32.totalorder %s34, %s35
      %p49 = scmp.eq.s32.totalorder %s27, 1
      %p50 = por %p48, %p49
      %p52 = scmp.ne.s32.totalorder %s35, %s51
      %p53 = scmp.eq.s32.totalorder %s27, 0
      %p54 = por %p52, %p53
      %s56 = sadd.s32 %s55, 1
      %p59 = scmp.eq.s32.totalorder %s21, 1
      %p60 = scmp.ne.s32.totalorder %s55, %s57
      %p61 = scmp.eq.s32.totalorder %s21, 0
      %p62 = por %p60, %p61
      %p63 = scmp.ne.s32.totalorder %s55, %s57
      %p64 = scmp.eq.s32.totalorder %s26, 1
      %p65 = por %p63, %p64
      %p66 = scmp.ne.s32.totalorder %s57, %s58
      %p67 = scmp.eq.s32.totalorder %s26, 0
      %p68 = por %p66, %p67
      %p69 = scmp.ne.s32.totalorder %s57, %s58
      %p70 = scmp.eq.s32.totalorder %s27, 1
      %p71 = por %p69, %p70
      %p73 = scmp.ne.s32.totalorder %s58, %s72
      %p74 = scmp.eq.s32.totalorder %s27, 0
      %p75 = por %p73, %p74
      %s77 = sadd.s32 %s76, 1
      %p80 = scmp.eq.s32.totalorder %s21, 1
      %p81 = scmp.ne.s32.totalorder %s76, %s78
      %p82 = scmp.eq.s32.totalorder %s21, 0
      %p83 = por %p81, %p82
      %p84 = scmp.ne.s32.totalorder %s76, %s78
      %p85 = scmp.eq.s32.totalorder %s26, 1
      %p86 = por %p84, %p85
      %p87 = scmp.ne.s32.totalorder %s78, %s79
      %p88 = scmp.eq.s32.totalorder %s26, 0
      %p89 = por %p87, %p88
      %p90 = scmp.ne.s32.totalorder %s78, %s79
      %p91 = scmp.eq.s32.totalorder %s27, 1
      %p92 = por %p90, %p91
      %p94 = scmp.ne.s32.totalorder %s79, %s93
      %p95 = scmp.eq.s32.totalorder %s27, 0
      %p96 = por %p94, %p95
      %s98 = sadd.s32 %s97, 1
      %p101 = scmp.eq.s32.totalorder %s21, 1
      %p102 = scmp.ne.s32.totalorder %s97, %s99
      %p103 = scmp.eq.s32.totalorder %s21, 0
      %p104 = por %p102, %p103
      %p105 = scmp.ne.s32.totalorder %s97, %s99
      %p106 = scmp.eq.s32.totalorder %s26, 1
      %p107 = por %p105, %p106
      %p108 = scmp.ne.s32.totalorder %s99, %s100
      %p109 = scmp.eq.s32.totalorder %s26, 0
      %p110 = por %p108, %p109
      %p111 = scmp.ne.s32.totalorder %s99, %s100
      %p112 = scmp.eq.s32.totalorder %s27, 1
      %p113 = por %p111, %p112
      %p115 = scmp.ne.s32.totalorder %s100, %s114
      %p116 = scmp.eq.s32.totalorder %s27, 0
      %p117 = por %p115, %p116
      %s119 = sadd.s32 %s118, 1
      %p122 = scmp.eq.s32.totalorder %s21, 1
      %p123 = scmp.ne.s32.totalorder %s118, %s120
      %p124 = scmp.eq.s32.totalorder %s21, 0
      %p125 = por %p123, %p124
      %p126 = scmp.ne.s32.totalorder %s118, %s120
      %p127 = scmp.eq.s32.totalorder %s26, 1
      %p128 = por %p126, %p127
      %p129 = scmp.ne.s32.totalorder %s120, %s121
      %p130 = scmp.eq.s32.totalorder %s26, 0
      %p131 = por %p129, %p130
      %p132 = scmp.ne.s32.totalorder %s120, %s121
      %p133 = scmp.eq.s32.totalorder %s27, 1
      %p134 = por %p132, %p133
      %p136 = scmp.ne.s32.totalorder %s121, %s135
      %p137 = scmp.eq.s32.totalorder %s27, 0
      %p138 = por %p136, %p137
      %s140 = sadd.s32 %s139, 1
      %p143 = scmp.eq.s32.totalorder %s21, 1
      %p144 = scmp.ne.s32.totalorder %s139, %s141
      %p145 = scmp.eq.s32.totalorder %s21, 0
      %p146 = por %p144, %p145
      %p147 = scmp.ne.s32.totalorder %s139, %s141
      %p148 = scmp.eq.s32.totalorder %s26, 1
      %p149 = por %p147, %p148
      %p150 = scmp.ne.s32.totalorder %s141, %s142
      %p151 = scmp.eq.s32.totalorder %s26, 0
      %p152 = por %p150, %p151
      %p153 = scmp.ne.s32.totalorder %s141, %s142
      %p154 = scmp.eq.s32.totalorder %s27, 1
      %p155 = por %p153, %p154
      %p157 = scmp.ne.s32.totalorder %s142, %s156
      %p158 = scmp.eq.s32.totalorder %s27, 0
      %p159 = por %p157, %p158
      %s161 = sadd.s32 %s160, 1
      %p164 = scmp.eq.s32.totalorder %s21, 1
      %p165 = scmp.ne.s32.totalorder %s160, %s162
      %p166 = scmp.eq.s32.totalorder %s21, 0
      %p167 = por %p165, %p166
      %p168 = scmp.ne.s32.totalorder %s160, %s162
      %p169 = scmp.eq.s32.totalorder %s26, 1
      %p170 = por %p168, %p169
      %p171 = scmp.ne.s32.totalorder %s162, %s163
      %p172 = scmp.eq.s32.totalorder %s26, 0
      %p173 = por %p171, %p172
      %p174 = scmp.ne.s32.totalorder %s162, %s163
      %p175 = scmp.eq.s32.totalorder %s27, 1
      %p176 = por %p174, %p175
      %p178 = scmp.ne.s32.totalorder %s163, %s177
      %p179 = scmp.eq.s32.totalorder %s27, 0
      %p180 = por %p178, %p179
      %s182 = sadd.s32 %s181, 1
      %p185 = scmp.eq.s32.totalorder %s21, 1
      %p186 = scmp.ne.s32.totalorder %s181, %s183
      %p187 = scmp.eq.s32.totalorder %s21, 0
      %p188 = por %p186, %p187
      %p189 = scmp.ne.s32.totalorder %s181, %s183
      %p190 = scmp.eq.s32.totalorder %s26, 1
      %p191 = por %p189, %p190
      %p192 = scmp.ne.s32.totalorder %s183, %s184
      %p193 = scmp.eq.s32.totalorder %s26, 0
      %p194 = por %p192, %p193
      %p195 = scmp.ne.s32.totalorder %s183, %s184
      %p196 = scmp.eq.s32.totalorder %s27, 1
      %p197 = por %p195, %p196
      %p199 = scmp.ne.s32.totalorder %s184, %s198
      %p200 = scmp.eq.s32.totalorder %s27, 0
      %p201 = por %p199, %p200
      %s202 = ssub.s32 %s21, %s28
      %p203 = scmp.eq.s32.totalorder %s202, 0
      %s205 = sadd.s32 %s204, 1
      %s206 = scalar_select %p203, %s204, %s205
      %p209 = pneg %p203
      %p210 = scmp.eq.s32.totalorder %s21, 1
      %p211 = por %p209, %p210
      %p212 = scmp.ne.s32.totalorder %s204, %s207
      %p213 = scmp.eq.s32.totalorder %s21, 0
      %p214 = por %p212, %p213
      %p215 = scmp.ne.s32.totalorder %s204, %s207
      %p216 = scmp.eq.s32.totalorder %s26, 1
      %p217 = por %p215, %p216
      %p218 = scmp.ne.s32.totalorder %s207, %s208
      %p219 = scmp.eq.s32.totalorder %s26, 0
      %p220 = por %p218, %p219
      %p221 = scmp.ne.s32.totalorder %s207, %s208
      %p222 = scmp.eq.s32.totalorder %s27, 1
      %p223 = por %p221, %p222
      %p225 = scmp.ne.s32.totalorder %s208, %s224
      %p226 = scmp.eq.s32.totalorder %s27, 0
      %p227 = por %p225, %p226
      %p228 = scmp.le.s32.totalorder 1, %s21
      %p229 = scmp.lt.s32.totalorder %s21, 3
      %p230 = pnand %p228, %p229
      %p231 = pneg %p230
      // Predicated region
      $region9: #{tpu_custom_call.1} parent=5 // pred_check
        _
      $region10: #{tpu_custom_call.1} parent=5 // pred_check_branch
        %233 = sbr.rel (%p230) target = $region12
      $region11: #{tpu_custom_call.1} parent=5 // pred_region
        %s234 = ssub.s32 %s21, 1
        // Predicated region
        $region13: #{tpu_custom_call.1} parent=11 // pred_check
          %p235 = pneg %p68
        $region14: #{tpu_custom_call.1} parent=11 // pred_check_branch
          %237 = sbr.rel (%p235) target = $region16
        $region15: #{tpu_custom_call.1} parent=11 // pred_region
          %s239 = ssub.s32 1024, 1024
          %240 = vsyncadd [#allocation6], %s239
          %s241 = sshll.u32 [#allocation5], 4
          %s242 = int_to_ptr.vmem [resolvable:$true] %s241
          %247 = dma.hbm_to_vmem [thread:$0]  %s1, 1024, %s242, [#allocation6], 64, 64, 4
        $region16: #{tpu_custom_call.1} parent=11 // pred_fallthru
          _
        // Predicated region
        $region17: #{tpu_custom_call.1} parent=11 // pred_check
          %p248 = pneg %p89
        $region18: #{tpu_custom_call.1} parent=11 // pred_check_branch
          %250 = sbr.rel (%p248) target = $region20
        $region19: #{tpu_custom_call.1} parent=11 // pred_region
          _
        $region20: #{tpu_custom_call.1} parent=11 // pred_fallthru
          _
        // Predicated region
        $region21: #{tpu_custom_call.1} parent=11 // pred_check
          %p251 = pneg %p110
        $region22: #{tpu_custom_call.1} parent=11 // pred_check_branch
          %253 = sbr.rel (%p251) target = $region24
        $region23: #{tpu_custom_call.1} parent=11 // pred_region
          _
        $region24: #{tpu_custom_call.1} parent=11 // pred_fallthru
          _
        // Predicated region
        $region25: #{tpu_custom_call.1} parent=11 // pred_check
          %p254 = pneg %p131
        $region26: #{tpu_custom_call.1} parent=11 // pred_check_branch
          %256 = sbr.rel (%p254) target = $region28
        $region27: #{tpu_custom_call.1} parent=11 // pred_region
          _
        $region28: #{tpu_custom_call.1} parent=11 // pred_fallthru
          _
        // Predicated region
        $region29: #{tpu_custom_call.1} parent=11 // pred_check
          %p257 = pneg %p152
        $region30: #{tpu_custom_call.1} parent=11 // pred_check_branch
          %259 = sbr.rel (%p257) target = $region32
        $region31: #{tpu_custom_call.1} parent=11 // pred_region
          %s261 = ssub.s32 1024, 1024
          %262 = vsyncadd [#allocation6], %s261
          %s263 = sshll.u32 [#allocation7], 4
          %s264 = int_to_ptr.vmem [resolvable:$true] %s263
          %269 = dma.hbm_to_vmem [thread:$0]  %s5, 1024, %s264, [#allocation6], 64, 64, 4
        $region32: #{tpu_custom_call.1} parent=11 // pred_fallthru
          _
        // Predicated region
        $region33: #{tpu_custom_call.1} parent=11 // pred_check
          %p270 = pneg %p173
        $region34: #{tpu_custom_call.1} parent=11 // pred_check_branch
          %272 = sbr.rel (%p270) target = $region36
        $region35: #{tpu_custom_call.1} parent=11 // pred_region
          _
        $region36: #{tpu_custom_call.1} parent=11 // pred_fallthru
          _
        // Predicated region
        $region37: #{tpu_custom_call.1} parent=11 // pred_check
          %p273 = pneg %p194
        $region38: #{tpu_custom_call.1} parent=11 // pred_check_branch
          %275 = sbr.rel (%p273) target = $region40
        $region39: #{tpu_custom_call.1} parent=11 // pred_region
          _
        $region40: #{tpu_custom_call.1} parent=11 // pred_fallthru
          _
      $region12: #{tpu_custom_call.1} parent=5 // pred_fallthru
        _
      %p276 = scmp.lt.s32.totalorder %s21, 2
      // Predicated region
      $region41: #{tpu_custom_call.1} parent=5 // pred_check
        %p277 = pneg %p276
      $region42: #{tpu_custom_call.1} parent=5 // pred_check_branch
        %279 = sbr.rel (%p277) target = $region44
      $region43: #{tpu_custom_call.1} parent=5 // pred_region
        // Predicated region
        $region45: #{tpu_custom_call.1} parent=43 // pred_check
          %p280 = pneg %p41
        $region46: #{tpu_custom_call.1} parent=43 // pred_check_branch
          %282 = sbr.rel (%p280) target = $region48
        $region47: #{tpu_custom_call.1} parent=43 // pred_region
          %s283 = sand.u32 %s31, 1
          %s284 = scalar_lea.sflag [#allocation3], %s283
          %s285 = sand.u32 %s31, 1
          %s286 = smul.addr %s285, 64
          %s287 = scalar_lea.vmem [#allocation2], %s286
          %s288 = smul.u32 16, %s21
          %s290 = ssub.s32 1024, 1024
          %291 = vsyncadd %s284, %s290
          %s292 = smul.addr %s288, 64
          %s293 = scalar_lea.hbm %s0, %s292
          %s294 = sshll.u32 %s287, 4
          %s295 = int_to_ptr.vmem [resolvable:$true] %s294
          %300 = dma.hbm_to_vmem [thread:$0]  %s293, 1024, %s295, %s284, 64, 64, 4
        $region48: #{tpu_custom_call.1} parent=43 // pred_fallthru
          _
      $region44: #{tpu_custom_call.1} parent=5 // pred_fallthru
        _
      %p301 = scmp.le.s32.totalorder 1, %s21
      %p302 = scmp.lt.s32.totalorder %s21, 3
      %p303 = pnand %p301, %p302
      %p304 = pneg %p303
      // Predicated region
      $region49: #{tpu_custom_call.1} parent=5 // pred_check
        _
      $region50: #{tpu_custom_call.1} parent=5 // pred_check_branch
        %306 = sbr.rel (%p303) target = $region52
      $region51: #{tpu_custom_call.1} parent=5 // pred_region
        %s307 = ssub.s32 %s21, 1
        %s308 = sand.u32 %s34, 1
        %s309 = scalar_lea.sflag [#allocation3], %s308
        %s310 = sand.u32 %s34, 1
        %s311 = smul.addr %s310, 64
        %s312 = scalar_lea.vmem [#allocation2], %s311
        // Predicated region
        $region53: #{tpu_custom_call.1} parent=51 // pred_check
          %p313 = pneg %p47
        $region54: #{tpu_custom_call.1} parent=51 // pred_check_branch
          %315 = sbr.rel (%p313) target = $region56
        $region55: #{tpu_custom_call.1} parent=51 // pred_region
          %316 = dma.done %s309, 1024
        $region56: #{tpu_custom_call.1} parent=51 // pred_fallthru
          _
        // Predicated region
        $region57: #{tpu_custom_call.1} parent=51 // pred_check
          %p317 = pneg %p68
        $region58: #{tpu_custom_call.1} parent=51 // pred_check_branch
          %319 = sbr.rel (%p317) target = $region60
        $region59: #{tpu_custom_call.1} parent=51 // pred_region
          %320 = dma.done [#allocation6], 1024
        $region60: #{tpu_custom_call.1} parent=51 // pred_fallthru
          _
        // Predicated region
        $region61: #{tpu_custom_call.1} parent=51 // pred_check
          %p321 = pneg %p152
        $region62: #{tpu_custom_call.1} parent=51 // pred_check_branch
          %323 = sbr.rel (%p321) target = $region64
        $region63: #{tpu_custom_call.1} parent=51 // pred_region
          %324 = dma.done [#allocation6], 1024
        $region64: #{tpu_custom_call.1} parent=51 // pred_fallthru
          _
        %s325 = sand.u32 %s34, 1
        %s326 = scalar_lea.sflag [#allocation3], %s325
        %s327 = sand.u32 %s34, 1
        %s328 = smul.addr %s327, 64
        %s329 = scalar_lea.vmem [#allocation2], %s328
        %p330 = pneg %p47
        %p331 = pneg %p44
        %p332 = pneg %p68
        %p333 = pneg %p65
        %p334 = pneg %p89
        %p335 = pneg %p86
        %p336 = pneg %p110
        %p337 = pneg %p107
        %p338 = pneg %p131
        %p339 = pneg %p128
        %p340 = pneg %p152
        %p341 = pneg %p149
        %p342 = pneg %p173
        %p343 = pneg %p170
        %p344 = pneg %p194
        %p345 = pneg %p191
        %p346 = pneg %p220
        %p347 = pneg %p217
        %s348 = sand.u32 %s207, 1
        %s349 = scalar_lea.sflag [#allocation4], %s348
        %s350 = sand.u32 %s207, 1
        %s351 = smul.addr %s350, 64
        %s352 = scalar_lea.vmem [#allocation8], %s351
        %s353 = smul.u32 16, %s26
        %s354 = smul.u32 16, %s26
        %v356 = vld [vmem:[%s312] sm:$0xf]
        %v357 = vld [vmem:[%s312 + $0x4] sm:$0xf]
        %v358 = vld [vmem:[%s312 + $0x8] sm:$0xf]
        %v359 = vld [vmem:[%s312 + $0xc] sm:$0xf]
        %v360 = vld [vmem:[%s312 + $0x10] sm:$0xf]
        %v361 = vld [vmem:[%s312 + $0x14] sm:$0xf]
        %v362 = vld [vmem:[%s312 + $0x18] sm:$0xf]
        %v363 = vld [vmem:[%s312 + $0x1c] sm:$0xf]
        %v364 = vld [vmem:[%s312 + $0x20] sm:$0xf]
        %v365 = vld [vmem:[%s312 + $0x24] sm:$0xf]
        %v366 = vld [vmem:[%s312 + $0x28] sm:$0xf]
        %v367 = vld [vmem:[%s312 + $0x2c] sm:$0xf]
        %v368 = vld [vmem:[%s312 + $0x30] sm:$0xf]
        %v369 = vld [vmem:[%s312 + $0x34] sm:$0xf]
        %v370 = vld [vmem:[%s312 + $0x38] sm:$0xf]
        %v371 = vld [vmem:[%s312 + $0x3c] sm:$0xf]
        %v372 = vld [vmem:[#allocation5] sm:$0xf]
        %v373 = vld [vmem:[#allocation5 + $0x4] sm:$0xf]
        %v374 = vld [vmem:[#allocation5 + $0x8] sm:$0xf]
        %v375 = vld [vmem:[#allocation5 + $0xc] sm:$0xf]
        %v376 = vld [vmem:[#allocation5 + $0x10] sm:$0xf]
        %v377 = vld [vmem:[#allocation5 + $0x14] sm:$0xf]
        %v378 = vld [vmem:[#allocation5 + $0x18] sm:$0xf]
        %v379 = vld [vmem:[#allocation5 + $0x1c] sm:$0xf]
        %v380 = vld [vmem:[#allocation5 + $0x20] sm:$0xf]
        %v381 = vld [vmem:[#allocation5 + $0x24] sm:$0xf]
        %v382 = vld [vmem:[#allocation5 + $0x28] sm:$0xf]
        %v383 = vld [vmem:[#allocation5 + $0x2c] sm:$0xf]
        %v384 = vld [vmem:[#allocation5 + $0x30] sm:$0xf]
        %v385 = vld [vmem:[#allocation5 + $0x34] sm:$0xf]
        %v386 = vld [vmem:[#allocation5 + $0x38] sm:$0xf]
        %v387 = vld [vmem:[#allocation5 + $0x3c] sm:$0xf]
        %v388 = vld [vmem:[%s2] sm:$0x1]
        %v390 = vlaneseq
        %v391 = vshrl.u32 %v390, 7
        %v392 = vsub.s32 0, %v391
        %v393 = vrot.slane %v388, %v392
        %v411 = vunpack.c.l.b16 %v356
        %v412 = vunpack.c.l.b16 %v357
        %v413 = vunpack.c.l.b16 %v358
        %v414 = vunpack.c.l.b16 %v359
        %v415 = vunpack.c.l.b16 %v360
        %v416 = vunpack.c.l.b16 %v361
        %v417 = vunpack.c.l.b16 %v362
        %v418 = vunpack.c.l.b16 %v363
        %v419 = vunpack.c.l.b16 %v364
        %v420 = vunpack.c.l.b16 %v365
        %v421 = vunpack.c.l.b16 %v366
        %v422 = vunpack.c.l.b16 %v367
        %v423 = vunpack.c.l.b16 %v368
        %v424 = vunpack.c.l.b16 %v369
        %v425 = vunpack.c.l.b16 %v370
        %v426 = vunpack.c.l.b16 %v371
        %v427 = vpack.c.b16 %v412, %v411
        %v428 = vpack.c.b16 %v414, %v413
        %v429 = vpack.c.b16 %v416, %v415
        %v430 = vpack.c.b16 %v418, %v417
        %v431 = vpack.c.b16 %v420, %v419
        %v432 = vpack.c.b16 %v422, %v421
        %v433 = vpack.c.b16 %v424, %v423
        %v434 = vpack.c.b16 %v426, %v425
        %v459 = vunpack.c.l.b16 %v372
        %v460 = vunpack.c.l.b16 %v373
        %v461 = vunpack.c.l.b16 %v374
        %v462 = vunpack.c.l.b16 %v375
        %v463 = vunpack.c.l.b16 %v376
        %v464 = vunpack.c.l.b16 %v377
        %v465 = vunpack.c.l.b16 %v378
        %v466 = vunpack.c.l.b16 %v379
        %v467 = vunpack.c.l.b16 %v380
        %v468 = vunpack.c.l.b16 %v381
        %v469 = vunpack.c.l.b16 %v382
        %v470 = vunpack.c.l.b16 %v383
        %v471 = vunpack.c.l.b16 %v384
        %v472 = vunpack.c.l.b16 %v385
        %v473 = vunpack.c.l.b16 %v386
        %v474 = vunpack.c.l.b16 %v387
        %v475 = vpack.c.b16 %v460, %v459
        %v476 = vpack.c.b16 %v462, %v461
        %v477 = vpack.c.b16 %v464, %v463
        %v478 = vpack.c.b16 %v466, %v465
        %v479 = vpack.c.b16 %v468, %v467
        %v480 = vpack.c.b16 %v470, %v469
        %v481 = vpack.c.b16 %v472, %v471
        %v482 = vpack.c.b16 %v474, %v473
        %491 = vmatprep.subr.bf16.mxu0 0
        %492 = vmatpush1.bf16.msra.mxu0 %v475
        %493 = vmatprep.subr.bf16.mxu0 0
        %494 = vmatpush1.bf16.msra.mxu0 %v476
        %495 = vmatprep.subr.bf16.mxu0 0
        %496 = vmatpush1.bf16.msra.mxu0 %v477
        %497 = vmatprep.subr.bf16.mxu0 0
        %498 = vmatpush1.bf16.msra.mxu0 %v478
        %499 = vmatprep.subr.bf16.mxu0 0
        %500 = vmatpush1.bf16.msra.mxu0 %v479
        %501 = vmatprep.subr.bf16.mxu0 0
        %502 = vmatpush1.bf16.msra.mxu0 %v480
        %503 = vmatprep.subr.bf16.mxu0 0
        %504 = vmatpush1.bf16.msra.mxu0 %v481
        %505 = vmatprep.subr.bf16.mxu0 0
        %506 = vmatpush1.bf16.msra.mxu0 %v482
        %507 = vmatprep.subr.bf16.mxu0 0
        %508 = vmatpush1.bf16.msra.mxu0 0
        %509 = vmatprep.subr.bf16.mxu0 0
        %510 = vmatpush1.bf16.msra.mxu0 0
        %511 = vmatprep.subr.bf16.mxu0 0
        %512 = vmatpush1.bf16.msra.mxu0 0
        %513 = vmatprep.subr.bf16.mxu0 0
        %514 = vmatpush1.bf16.msra.mxu0 0
        %515 = vmatprep.subr.bf16.mxu0 0
        %516 = vmatpush1.bf16.msra.mxu0 0
        %517 = vmatprep.subr.bf16.mxu0 0
        %518 = vmatpush1.bf16.msra.mxu0 0
        %519 = vmatprep.subr.bf16.mxu0 0
        %520 = vmatpush1.bf16.msra.mxu0 0
        %521 = vmatprep.subr.bf16.mxu0 0
        %522 = vmatpush1.bf16.msra.mxu0 0
        %523 = vmatprep.mubr.bf16.mxu0 0
        %524 = vmatmul.mubr.bf16.gmra.mrb[0].mxu0 %v427
        %v525 = vpop.f32.mrb[0].mxu0
        %v526 = vadd.f32 %v393, %v525
        %v527 = vpop.f32.mrb[0].mxu0
        %v528 = vpop.f32.mrb[0].mxu0
        %v529 = vadd.f32 %v393, %v528
        %v530 = vpop.f32.mrb[0].mxu0
        %531 = vmatprep.mubr.bf16.mxu0 0
        %532 = vmatmul.mubr.bf16.gmra.mrb[0].mxu0 %v428
        %v533 = vpop.f32.mrb[0].mxu0
        %v534 = vadd.f32 %v393, %v533
        %v535 = vpop.f32.mrb[0].mxu0
        %v536 = vpop.f32.mrb[0].mxu0
        %v537 = vadd.f32 %v393, %v536
        %v538 = vpop.f32.mrb[0].mxu0
        %539 = vmatprep.mubr.bf16.mxu0 0
        %540 = vmatmul.mubr.bf16.gmra.mrb[0].mxu0 %v429
        %v541 = vpop.f32.mrb[0].mxu0
        %v542 = vadd.f32 %v393, %v541
        %v543 = vpop.f32.mrb[0].mxu0
        %v544 = vpop.f32.mrb[0].mxu0
        %v545 = vadd.f32 %v393, %v544
        %v546 = vpop.f32.mrb[0].mxu0
        %547 = vmatprep.mubr.bf16.mxu0 0
        %548 = vmatmul.mubr.bf16.gmra.mrb[0].mxu0 %v430
        %v549 = vpop.f32.mrb[0].mxu0
        %v550 = vadd.f32 %v393, %v549
        %v551 = vpop.f32.mrb[0].mxu0
        %v552 = vpop.f32.mrb[0].mxu0
        %v553 = vadd.f32 %v393, %v552
        %v554 = vpop.f32.mrb[0].mxu0
        %555 = vmatprep.mubr.bf16.mxu0 0
        %556 = vmatmul.mubr.bf16.gmra.mrb[0].mxu0 %v431
        %v557 = vpop.f32.mrb[0].mxu0
        %v558 = vadd.f32 %v393, %v557
        %v559 = vpop.f32.mrb[0].mxu0
        %v560 = vpop.f32.mrb[0].mxu0
        %v561 = vadd.f32 %v393, %v560
        %v562 = vpop.f32.mrb[0].mxu0
        %563 = vmatprep.mubr.bf16.mxu0 0
        %564 = vmatmul.mubr.bf16.gmra.mrb[0].mxu0 %v432
        %v565 = vpop.f32.mrb[0].mxu0
        %v566 = vadd.f32 %v393, %v565
        %v567 = vpop.f32.mrb[0].mxu0
        %v568 = vpop.f32.mrb[0].mxu0
        %v569 = vadd.f32 %v393, %v568
        %v570 = vpop.f32.mrb[0].mxu0
        %571 = vmatprep.mubr.bf16.mxu0 0
        %572 = vmatmul.mubr.bf16.gmra.mrb[0].mxu0 %v433
        %v573 = vpop.f32.mrb[0].mxu0
        %v574 = vadd.f32 %v393, %v573
        %v575 = vpop.f32.mrb[0].mxu0
        %v576 = vpop.f32.mrb[0].mxu0
        %v577 = vadd.f32 %v393, %v576
        %v578 = vpop.f32.mrb[0].mxu0
        %579 = vmatprep.mubr.bf16.mxu0 0
        %580 = vmatmul.mubr.bf16.gmra.mrb[0].mxu0 %v434
        %v581 = vpop.f32.mrb[0].mxu0
        %v582 = vadd.f32 %v393, %v581
        %v583 = vpop.f32.mrb[0].mxu0
        %v584 = vpop.f32.mrb[0].mxu0
        %v585 = vadd.f32 %v393, %v584
        %v586 = vpop.f32.mrb[0].mxu0
        %587 = vdwg.mxu0
        %v588 = vmul.f32 %v526, 0.5
        %v589 = vmul.f32 %v529, 0.5
        %v590 = vmul.f32 %v534, 0.5
        %v591 = vmul.f32 %v537, 0.5
        %v592 = vmul.f32 %v542, 0.5
        %v593 = vmul.f32 %v545, 0.5
        %v594 = vmul.f32 %v550, 0.5
        %v595 = vmul.f32 %v553, 0.5
        %v596 = vmul.f32 %v558, 0.5
        %v597 = vmul.f32 %v561, 0.5
        %v598 = vmul.f32 %v566, 0.5
        %v599 = vmul.f32 %v569, 0.5
        %v600 = vmul.f32 %v574, 0.5
        %v601 = vmul.f32 %v577, 0.5
        %v602 = vmul.f32 %v582, 0.5
        %v603 = vmul.f32 %v585, 0.5
        %v604 = vmul.f32 %v526, 0.70710677
        %v605 = vmul.f32 %v529, 0.70710677
        %v606 = vmul.f32 %v534, 0.70710677
        %v607 = vmul.f32 %v537, 0.70710677
        %v608 = vmul.f32 %v542, 0.70710677
        %v609 = vmul.f32 %v545, 0.70710677
        %v610 = vmul.f32 %v550, 0.70710677
        %v611 = vmul.f32 %v553, 0.70710677
        %v612 = vmul.f32 %v558, 0.70710677
        %v613 = vmul.f32 %v561, 0.70710677
        %v614 = vmul.f32 %v566, 0.70710677
        %v615 = vmul.f32 %v569, 0.70710677
        %v616 = vmul.f32 %v574, 0.70710677
        %v617 = vmul.f32 %v577, 0.70710677
        %v618 = vmul.f32 %v582, 0.70710677
        %v619 = vmul.f32 %v585, 0.70710677
        %v620 = verf.f32.pop %v604
        %v621 = verf.f32.pop %v605
        %v622 = verf.f32.pop %v606
        %v623 = verf.f32.pop %v607
        %v624 = verf.f32.pop %v608
        %v625 = verf.f32.pop %v609
        %v626 = verf.f32.pop %v610
        %v627 = verf.f32.pop %v611
        %v628 = verf.f32.pop %v612
        %v629 = verf.f32.pop %v613
        %v630 = verf.f32.pop %v614
        %v631 = verf.f32.pop %v615
        %v632 = verf.f32.pop %v616
        %v633 = verf.f32.pop %v617
        %v634 = verf.f32.pop %v618
        %v635 = verf.f32.pop %v619
        %v636 = vadd.f32 %v620, 1.0
        %v637 = vadd.f32 %v621, 1.0
        %v638 = vadd.f32 %v622, 1.0
        %v639 = vadd.f32 %v623, 1.0
        %v640 = vadd.f32 %v624, 1.0
        %v641 = vadd.f32 %v625, 1.0
        %v642 = vadd.f32 %v626, 1.0
        %v643 = vadd.f32 %v627, 1.0
        %v644 = vadd.f32 %v628, 1.0
        %v645 = vadd.f32 %v629, 1.0
        %v646 = vadd.f32 %v630, 1.0
        %v647 = vadd.f32 %v631, 1.0
        %v648 = vadd.f32 %v632, 1.0
        %v649 = vadd.f32 %v633, 1.0
        %v650 = vadd.f32 %v634, 1.0
        %v651 = vadd.f32 %v635, 1.0
        %v652 = vmul.f32 %v588, %v636
        %v653 = vmul.f32 %v589, %v637
        %v654 = vmul.f32 %v590, %v638
        %v655 = vmul.f32 %v591, %v639
        %v656 = vmul.f32 %v592, %v640
        %v657 = vmul.f32 %v593, %v641
        %v658 = vmul.f32 %v594, %v642
        %v659 = vmul.f32 %v595, %v643
        %v660 = vmul.f32 %v596, %v644
        %v661 = vmul.f32 %v597, %v645
        %v662 = vmul.f32 %v598, %v646
        %v663 = vmul.f32 %v599, %v647
        %v664 = vmul.f32 %v600, %v648
        %v665 = vmul.f32 %v601, %v649
        %v666 = vmul.f32 %v602, %v650
        %v667 = vmul.f32 %v603, %v651
        %668 = vadd.xlane.f32.xlu0 %v652
        %v669 = vpop.xlane.xlu0 %668
        %670 = vadd.xlane.f32.xlu0 %v653
        %v671 = vpop.xlane.xlu0 %670
        %672 = vadd.xlane.f32.xlu0 %v654
        %v673 = vpop.xlane.xlu0 %672
        %674 = vadd.xlane.f32.xlu0 %v655
        %v675 = vpop.xlane.xlu0 %674
        %676 = vadd.xlane.f32.xlu0 %v656
        %v677 = vpop.xlane.xlu0 %676
        %678 = vadd.xlane.f32.xlu0 %v657
        %v679 = vpop.xlane.xlu0 %678
        %680 = vadd.xlane.f32.xlu0 %v658
        %v681 = vpop.xlane.xlu0 %680
        %682 = vadd.xlane.f32.xlu0 %v659
        %v683 = vpop.xlane.xlu0 %682
        %684 = vadd.xlane.f32.xlu0 %v660
        %v685 = vpop.xlane.xlu0 %684
        %686 = vadd.xlane.f32.xlu0 %v661
        %v687 = vpop.xlane.xlu0 %686
        %688 = vadd.xlane.f32.xlu0 %v662
        %v689 = vpop.xlane.xlu0 %688
        %690 = vadd.xlane.f32.xlu0 %v663
        %v691 = vpop.xlane.xlu0 %690
        %692 = vadd.xlane.f32.xlu0 %v664
        %v693 = vpop.xlane.xlu0 %692
        %694 = vadd.xlane.f32.xlu0 %v665
        %v695 = vpop.xlane.xlu0 %694
        %696 = vadd.xlane.f32.xlu0 %v666
        %v697 = vpop.xlane.xlu0 %696
        %698 = vadd.xlane.f32.xlu0 %v667
        %v699 = vpop.xlane.xlu0 %698
        %v700 = vmul.f32 %v669, 0.015625
        %v701 = vmul.f32 %v671, 0.015625
        %v702 = vmul.f32 %v673, 0.015625
        %v703 = vmul.f32 %v675, 0.015625
        %v704 = vmul.f32 %v677, 0.015625
        %v705 = vmul.f32 %v679, 0.015625
        %v706 = vmul.f32 %v681, 0.015625
        %v707 = vmul.f32 %v683, 0.015625
        %v708 = vmul.f32 %v685, 0.015625
        %v709 = vmul.f32 %v687, 0.015625
        %v710 = vmul.f32 %v689, 0.015625
        %v711 = vmul.f32 %v691, 0.015625
        %v712 = vmul.f32 %v693, 0.015625
        %v713 = vmul.f32 %v695, 0.015625
        %v714 = vmul.f32 %v697, 0.015625
        %v715 = vmul.f32 %v699, 0.015625
        %v716 = vsub.f32 %v652, %v700
        %v717 = vsub.f32 %v653, %v701
        %v718 = vsub.f32 %v654, %v702
        %v719 = vsub.f32 %v655, %v703
        %v720 = vsub.f32 %v656, %v704
        %v721 = vsub.f32 %v657, %v705
        %v722 = vsub.f32 %v658, %v706
        %v723 = vsub.f32 %v659, %v707
        %v724 = vsub.f32 %v660, %v708
        %v725 = vsub.f32 %v661, %v709
        %v726 = vsub.f32 %v662, %v710
        %v727 = vsub.f32 %v663, %v711
        %v728 = vsub.f32 %v664, %v712
        %v729 = vsub.f32 %v665, %v713
        %v730 = vsub.f32 %v666, %v714
        %v731 = vsub.f32 %v667, %v715
        %v732 = vld [vmem:[%s7] sm:$0x1]
        %v734 = vlaneseq
        %v735 = vshrl.u32 %v734, 7
        %v736 = vsub.s32 0, %v735
        %v737 = vrot.slane %v732, %v736
        %v739 = vmul.f32 %v716, %v737
        %v740 = vmul.f32 %v717, %v737
        %v741 = vmul.f32 %v718, %v737
        %v742 = vmul.f32 %v719, %v737
        %v743 = vmul.f32 %v720, %v737
        %v744 = vmul.f32 %v721, %v737
        %v745 = vmul.f32 %v722, %v737
        %v746 = vmul.f32 %v723, %v737
        %v747 = vmul.f32 %v724, %v737
        %v748 = vmul.f32 %v725, %v737
        %v749 = vmul.f32 %v726, %v737
        %v750 = vmul.f32 %v727, %v737
        %v751 = vmul.f32 %v728, %v737
        %v752 = vmul.f32 %v729, %v737
        %v753 = vmul.f32 %v730, %v737
        %v754 = vmul.f32 %v731, %v737
        %v755 = vmul.f32 %v739, %v739
        %v756 = vmul.f32 %v740, %v740
        %v757 = vmul.f32 %v741, %v741
        %v758 = vmul.f32 %v742, %v742
        %v759 = vmul.f32 %v743, %v743
        %v760 = vmul.f32 %v744, %v744
        %v761 = vmul.f32 %v745, %v745
        %v762 = vmul.f32 %v746, %v746
        %v763 = vmul.f32 %v747, %v747
        %v764 = vmul.f32 %v748, %v748
        %v765 = vmul.f32 %v749, %v749
        %v766 = vmul.f32 %v750, %v750
        %v767 = vmul.f32 %v751, %v751
        %v768 = vmul.f32 %v752, %v752
        %v769 = vmul.f32 %v753, %v753
        %v770 = vmul.f32 %v754, %v754
        %771 = vadd.xlane.f32.xlu0 %v755
        %v772 = vpop.xlane.xlu0 %771
        %773 = vadd.xlane.f32.xlu0 %v756
        %v774 = vpop.xlane.xlu0 %773
        %775 = vadd.xlane.f32.xlu0 %v757
        %v776 = vpop.xlane.xlu0 %775
        %777 = vadd.xlane.f32.xlu0 %v758
        %v778 = vpop.xlane.xlu0 %777
        %779 = vadd.xlane.f32.xlu0 %v759
        %v780 = vpop.xlane.xlu0 %779
        %781 = vadd.xlane.f32.xlu0 %v760
        %v782 = vpop.xlane.xlu0 %781
        %783 = vadd.xlane.f32.xlu0 %v761
        %v784 = vpop.xlane.xlu0 %783
        %785 = vadd.xlane.f32.xlu0 %v762
        %v786 = vpop.xlane.xlu0 %785
        %787 = vadd.xlane.f32.xlu0 %v763
        %v788 = vpop.xlane.xlu0 %787
        %789 = vadd.xlane.f32.xlu0 %v764
        %v790 = vpop.xlane.xlu0 %789
        %791 = vadd.xlane.f32.xlu0 %v765
        %v792 = vpop.xlane.xlu0 %791
        %793 = vadd.xlane.f32.xlu0 %v766
        %v794 = vpop.xlane.xlu0 %793
        %795 = vadd.xlane.f32.xlu0 %v767
        %v796 = vpop.xlane.xlu0 %795
        %797 = vadd.xlane.f32.xlu0 %v768
        %v798 = vpop.xlane.xlu0 %797
        %799 = vadd.xlane.f32.xlu0 %v769
        %v800 = vpop.xlane.xlu0 %799
        %801 = vadd.xlane.f32.xlu0 %v770
        %v802 = vpop.xlane.xlu0 %801
        %v803 = vmul.f32 %v772, 0.015625
        %v804 = vmul.f32 %v774, 0.015625
        %v805 = vmul.f32 %v776, 0.015625
        %v806 = vmul.f32 %v778, 0.015625
        %v807 = vmul.f32 %v780, 0.015625
        %v808 = vmul.f32 %v782, 0.015625
        %v809 = vmul.f32 %v784, 0.015625
        %v810 = vmul.f32 %v786, 0.015625
        %v811 = vmul.f32 %v788, 0.015625
        %v812 = vmul.f32 %v790, 0.015625
        %v813 = vmul.f32 %v792, 0.015625
        %v814 = vmul.f32 %v794, 0.015625
        %v815 = vmul.f32 %v796, 0.015625
        %v816 = vmul.f32 %v798, 0.015625
        %v817 = vmul.f32 %v800, 0.015625
        %v818 = vmul.f32 %v802, 0.015625
        %v819 = vadd.f32 %v803, 1e-05
        %v820 = vadd.f32 %v804, 1e-05
        %v821 = vadd.f32 %v805, 1e-05
        %v822 = vadd.f32 %v806, 1e-05
        %v823 = vadd.f32 %v807, 1e-05
        %v824 = vadd.f32 %v808, 1e-05
        %v825 = vadd.f32 %v809, 1e-05
        %v826 = vadd.f32 %v810, 1e-05
        %v827 = vadd.f32 %v811, 1e-05
        %v828 = vadd.f32 %v812, 1e-05
        %v829 = vadd.f32 %v813, 1e-05
        %v830 = vadd.f32 %v814, 1e-05
        %v831 = vadd.f32 %v815, 1e-05
        %v832 = vadd.f32 %v816, 1e-05
        %v833 = vadd.f32 %v817, 1e-05
        %v834 = vadd.f32 %v818, 1e-05
        %v835 = vrsqrt.pop %v819
        %v836 = vrsqrt.pop %v820
        %v837 = vrsqrt.pop %v821
        %v838 = vrsqrt.pop %v822
        %v839 = vrsqrt.pop %v823
        %v840 = vrsqrt.pop %v824
        %v841 = vrsqrt.pop %v825
        %v842 = vrsqrt.pop %v826
        %v843 = vrsqrt.pop %v827
        %v844 = vrsqrt.pop %v828
        %v845 = vrsqrt.pop %v829
        %v846 = vrsqrt.pop %v830
        %v847 = vrsqrt.pop %v831
        %v848 = vrsqrt.pop %v832
        %v849 = vrsqrt.pop %v833
        %v850 = vrsqrt.pop %v834
        %v851 = vmul.f32 %v716, %v835
        %v852 = vmul.f32 %v717, %v836
        %v853 = vmul.f32 %v718, %v837
        %v854 = vmul.f32 %v719, %v838
        %v855 = vmul.f32 %v720, %v839
        %v856 = vmul.f32 %v721, %v840
        %v857 = vmul.f32 %v722, %v841
        %v858 = vmul.f32 %v723, %v842
        %v859 = vmul.f32 %v724, %v843
        %v860 = vmul.f32 %v725, %v844
        %v861 = vmul.f32 %v726, %v845
        %v862 = vmul.f32 %v727, %v846
        %v863 = vmul.f32 %v728, %v847
        %v864 = vmul.f32 %v729, %v848
        %v865 = vmul.f32 %v730, %v849
        %v866 = vmul.f32 %v731, %v850
        %v867 = vld [vmem:[%s3] sm:$0x1]
        %v869 = vlaneseq
        %v870 = vshrl.u32 %v869, 7
        %v871 = vsub.s32 0, %v870
        %v872 = vrot.slane %v867, %v871
        %v874 = vmul.f32 %v851, %v872
        %v875 = vmul.f32 %v852, %v872
        %v876 = vmul.f32 %v853, %v872
        %v877 = vmul.f32 %v854, %v872
        %v878 = vmul.f32 %v855, %v872
        %v879 = vmul.f32 %v856, %v872
        %v880 = vmul.f32 %v857, %v872
        %v881 = vmul.f32 %v858, %v872
        %v882 = vmul.f32 %v859, %v872
        %v883 = vmul.f32 %v860, %v872
        %v884 = vmul.f32 %v861, %v872
        %v885 = vmul.f32 %v862, %v872
        %v886 = vmul.f32 %v863, %v872
        %v887 = vmul.f32 %v864, %v872
        %v888 = vmul.f32 %v865, %v872
        %v889 = vmul.f32 %v866, %v872
        %v890 = vld [vmem:[%s4] sm:$0x1]
        %v892 = vlaneseq
        %v893 = vshrl.u32 %v892, 7
        %v894 = vsub.s32 0, %v893
        %v895 = vrot.slane %v890, %v894
        %v897 = vadd.f32 %v874, %v895
        %v898 = vadd.f32 %v875, %v895
        %v899 = vadd.f32 %v876, %v895
        %v900 = vadd.f32 %v877, %v895
        %v901 = vadd.f32 %v878, %v895
        %v902 = vadd.f32 %v879, %v895
        %v903 = vadd.f32 %v880, %v895
        %v904 = vadd.f32 %v881, %v895
        %v905 = vadd.f32 %v882, %v895
        %v906 = vadd.f32 %v883, %v895
        %v907 = vadd.f32 %v884, %v895
        %v908 = vadd.f32 %v885, %v895
        %v909 = vadd.f32 %v886, %v895
        %v910 = vadd.f32 %v887, %v895
        %v911 = vadd.f32 %v888, %v895
        %v912 = vadd.f32 %v889, %v895
        %v913 = vpack.c.bf16 %v898, %v897
        %v914 = vpack.c.bf16 %v900, %v899
        %v915 = vpack.c.bf16 %v902, %v901
        %v916 = vpack.c.bf16 %v904, %v903
        %v917 = vpack.c.bf16 %v906, %v905
        %v918 = vpack.c.bf16 %v908, %v907
        %v919 = vpack.c.bf16 %v910, %v909
        %v920 = vpack.c.bf16 %v912, %v911
        %v921 = vld [vmem:[#allocation7] sm:$0xf]
        %v922 = vld [vmem:[#allocation7 + $0x4] sm:$0xf]
        %v923 = vld [vmem:[#allocation7 + $0x8] sm:$0xf]
        %v924 = vld [vmem:[#allocation7 + $0xc] sm:$0xf]
        %v925 = vld [vmem:[#allocation7 + $0x10] sm:$0xf]
        %v926 = vld [vmem:[#allocation7 + $0x14] sm:$0xf]
        %v927 = vld [vmem:[#allocation7 + $0x18] sm:$0xf]
        %v928 = vld [vmem:[#allocation7 + $0x1c] sm:$0xf]
        %v929 = vld [vmem:[#allocation7 + $0x20] sm:$0xf]
        %v930 = vld [vmem:[#allocation7 + $0x24] sm:$0xf]
        %v931 = vld [vmem:[#allocation7 + $0x28] sm:$0xf]
        %v932 = vld [vmem:[#allocation7 + $0x2c] sm:$0xf]
        %v933 = vld [vmem:[#allocation7 + $0x30] sm:$0xf]
        %v934 = vld [vmem:[#allocation7 + $0x34] sm:$0xf]
        %v935 = vld [vmem:[#allocation7 + $0x38] sm:$0xf]
        %v936 = vld [vmem:[#allocation7 + $0x3c] sm:$0xf]
        %v937 = vld [vmem:[%s6] sm:$0x1]
        %v939 = vlaneseq
        %v940 = vshrl.u32 %v939, 7
        %v941 = vsub.s32 0, %v940
        %v942 = vrot.slane %v937, %v941
        %v960 = vunpack.c.l.b16 %v921
        %v961 = vunpack.c.l.b16 %v922
        %v962 = vunpack.c.l.b16 %v923
        %v963 = vunpack.c.l.b16 %v924
        %v964 = vunpack.c.l.b16 %v925
        %v965 = vunpack.c.l.b16 %v926
        %v966 = vunpack.c.l.b16 %v927
        %v967 = vunpack.c.l.b16 %v928
        %v968 = vunpack.c.l.b16 %v929
        %v969 = vunpack.c.l.b16 %v930
        %v970 = vunpack.c.l.b16 %v931
        %v971 = vunpack.c.l.b16 %v932
        %v972 = vunpack.c.l.b16 %v933
        %v973 = vunpack.c.l.b16 %v934
        %v974 = vunpack.c.l.b16 %v935
        %v975 = vunpack.c.l.b16 %v936
        %v976 = vpack.c.b16 %v961, %v960
        %v977 = vpack.c.b16 %v963, %v962
        %v978 = vpack.c.b16 %v965, %v964
        %v979 = vpack.c.b16 %v967, %v966
        %v980 = vpack.c.b16 %v969, %v968
        %v981 = vpack.c.b16 %v971, %v970
        %v982 = vpack.c.b16 %v973, %v972
        %v983 = vpack.c.b16 %v975, %v974
        %992 = vmatprep.subr.bf16.mxu0 0
        %993 = vmatpush1.bf16.msra.mxu0 %v976
        %994 = vmatprep.subr.bf16.mxu0 0
        %995 = vmatpush1.bf16.msra.mxu0 %v977
        %996 = vmatprep.subr.bf16.mxu0 0
        %997 = vmatpush1.bf16.msra.mxu0 %v978
        %998 = vmatprep.subr.bf16.mxu0 0
        %999 = vmatpush1.bf16.msra.mxu0 %v979
        %1000 = vmatprep.subr.bf16.mxu0 0
        %1001 = vmatpush1.bf16.msra.mxu0 %v980
        %1002 = vmatprep.subr.bf16.mxu0 0
        %1003 = vmatpush1.bf16.msra.mxu0 %v981
        %1004 = vmatprep.subr.bf16.mxu0 0
        %1005 = vmatpush1.bf16.msra.mxu0 %v982
        %1006 = vmatprep.subr.bf16.mxu0 0
        %1007 = vmatpush1.bf16.msra.mxu0 %v983
        %1008 = vmatprep.subr.bf16.mxu0 0
        %1009 = vmatpush1.bf16.msra.mxu0 0
        %1010 = vmatprep.subr.bf16.mxu0 0
        %1011 = vmatpush1.bf16.msra.mxu0 0
        %1012 = vmatprep.subr.bf16.mxu0 0
        %1013 = vmatpush1.bf16.msra.mxu0 0
        %1014 = vmatprep.subr.bf16.mxu0 0
        %1015 = vmatpush1.bf16.msra.mxu0 0
        %1016 = vmatprep.subr.bf16.mxu0 0
        %1017 = vmatpush1.bf16.msra.mxu0 0
        %1018 = vmatprep.subr.bf16.mxu0 0
        %1019 = vmatpush1.bf16.msra.mxu0 0
        %1020 = vmatprep.subr.bf16.mxu0 0
        %1021 = vmatpush1.bf16.msra.mxu0 0
        %1022 = vmatprep.subr.bf16.mxu0 0
        %1023 = vmatpush1.bf16.msra.mxu0 0
        %1024 = vmatprep.mubr.bf16.mxu0 0
        %1025 = vmatmul.mubr.bf16.gmra.mrb[0].mxu0 %v913
        %v1026 = vpop.f32.mrb[0].mxu0
        %v1027 = vadd.f32 %v942, %v1026
        %v1028 = vpop.f32.mrb[0].mxu0
        %v1029 = vpop.f32.mrb[0].mxu0
        %v1030 = vadd.f32 %v942, %v1029
        %v1031 = vpop.f32.mrb[0].mxu0
        %1032 = vmatprep.mubr.bf16.mxu0 0
        %1033 = vmatmul.mubr.bf16.gmra.mrb[0].mxu0 %v914
        %v1034 = vpop.f32.mrb[0].mxu0
        %v1035 = vadd.f32 %v942, %v1034
        %v1036 = vpop.f32.mrb[0].mxu0
        %v1037 = vpop.f32.mrb[0].mxu0
        %v1038 = vadd.f32 %v942, %v1037
        %v1039 = vpop.f32.mrb[0].mxu0
        %1040 = vmatprep.mubr.bf16.mxu0 0
        %1041 = vmatmul.mubr.bf16.gmra.mrb[0].mxu0 %v915
        %v1042 = vpop.f32.mrb[0].mxu0
        %v1043 = vadd.f32 %v942, %v1042
        %v1044 = vpop.f32.mrb[0].mxu0
        %v1045 = vpop.f32.mrb[0].mxu0
        %v1046 = vadd.f32 %v942, %v1045
        %v1047 = vpop.f32.mrb[0].mxu0
        %1048 = vmatprep.mubr.bf16.mxu0 0
        %1049 = vmatmul.mubr.bf16.gmra.mrb[0].mxu0 %v916
        %v1050 = vpop.f32.mrb[0].mxu0
        %v1051 = vadd.f32 %v942, %v1050
        %v1052 = vpop.f32.mrb[0].mxu0
        %v1053 = vpop.f32.mrb[0].mxu0
        %v1054 = vadd.f32 %v942, %v1053
        %v1055 = vpop.f32.mrb[0].mxu0
        %1056 = vmatprep.mubr.bf16.mxu0 0
        %1057 = vmatmul.mubr.bf16.gmra.mrb[0].mxu0 %v917
        %v1058 = vpop.f32.mrb[0].mxu0
        %v1059 = vadd.f32 %v942, %v1058
        %v1060 = vpop.f32.mrb[0].mxu0
        %v1061 = vpop.f32.mrb[0].mxu0
        %v1062 = vadd.f32 %v942, %v1061
        %v1063 = vpop.f32.mrb[0].mxu0
        %1064 = vmatprep.mubr.bf16.mxu0 0
        %1065 = vmatmul.mubr.bf16.gmra.mrb[0].mxu0 %v918
        %v1066 = vpop.f32.mrb[0].mxu0
        %v1067 = vadd.f32 %v942, %v1066
        %v1068 = vpop.f32.mrb[0].mxu0
        %v1069 = vpop.f32.mrb[0].mxu0
        %v1070 = vadd.f32 %v942, %v1069
        %v1071 = vpop.f32.mrb[0].mxu0
        %1072 = vmatprep.mubr.bf16.mxu0 0
        %1073 = vmatmul.mubr.bf16.gmra.mrb[0].mxu0 %v919
        %v1074 = vpop.f32.mrb[0].mxu0
        %v1075 = vadd.f32 %v942, %v1074
        %v1076 = vpop.f32.mrb[0].mxu0
        %v1077 = vpop.f32.mrb[0].mxu0
        %v1078 = vadd.f32 %v942, %v1077
        %v1079 = vpop.f32.mrb[0].mxu0
        %1080 = vmatprep.mubr.bf16.mxu0 0
        %1081 = vmatmul.mubr.bf16.gmra.mrb[0].mxu0 %v920
        %v1082 = vpop.f32.mrb[0].mxu0
        %v1083 = vadd.f32 %v942, %v1082
        %v1084 = vpop.f32.mrb[0].mxu0
        %v1085 = vpop.f32.mrb[0].mxu0
        %v1086 = vadd.f32 %v942, %v1085
        %v1087 = vpop.f32.mrb[0].mxu0
        %1088 = vdwg.mxu0
        %v1089 = vpack.c.bf16 %v1030, %v1027
        %v1090 = vpack.c.bf16 %v1038, %v1035
        %v1091 = vpack.c.bf16 %v1046, %v1043
        %v1092 = vpack.c.bf16 %v1054, %v1051
        %v1093 = vpack.c.bf16 %v1062, %v1059
        %v1094 = vpack.c.bf16 %v1070, %v1067
        %v1095 = vpack.c.bf16 %v1078, %v1075
        %v1096 = vpack.c.bf16 %v1086, %v1083
        %v1105 = vunpack.c.l.b16 %v1089
        %v1106 = vunpack.c.h.b16 %v1089
        %v1107 = vunpack.c.l.b16 %v1090
        %v1108 = vunpack.c.h.b16 %v1090
        %v1109 = vunpack.c.l.b16 %v1091
        %v1110 = vunpack.c.h.b16 %v1091
        %v1111 = vunpack.c.l.b16 %v1092
        %v1112 = vunpack.c.h.b16 %v1092
        %v1113 = vunpack.c.l.b16 %v1093
        %v1114 = vunpack.c.h.b16 %v1093
        %v1115 = vunpack.c.l.b16 %v1094
        %v1116 = vunpack.c.h.b16 %v1094
        %v1117 = vunpack.c.l.b16 %v1095
        %v1118 = vunpack.c.h.b16 %v1095
        %v1119 = vunpack.c.l.b16 %v1096
        %v1120 = vunpack.c.h.b16 %v1096
        %v1121 = vpack.c.b16 %v1105, %v1105
        %v1122 = vpack.c.b16 %v1106, %v1106
        %v1123 = vpack.c.b16 %v1107, %v1107
        %v1124 = vpack.c.b16 %v1108, %v1108
        %v1125 = vpack.c.b16 %v1109, %v1109
        %v1126 = vpack.c.b16 %v1110, %v1110
        %v1127 = vpack.c.b16 %v1111, %v1111
        %v1128 = vpack.c.b16 %v1112, %v1112
        %v1129 = vpack.c.b16 %v1113, %v1113
        %v1130 = vpack.c.b16 %v1114, %v1114
        %v1131 = vpack.c.b16 %v1115, %v1115
        %v1132 = vpack.c.b16 %v1116, %v1116
        %v1133 = vpack.c.b16 %v1117, %v1117
        %v1134 = vpack.c.b16 %v1118, %v1118
        %v1135 = vpack.c.b16 %v1119, %v1119
        %v1136 = vpack.c.b16 %v1120, %v1120
        %1153 = vst [vmem:[%s352] sm:$0xf] %v1121
        %1154 = vst [vmem:[%s352 + $0x4] sm:$0xf] %v1122
        %1155 = vst [vmem:[%s352 + $0x8] sm:$0xf] %v1123
        %1156 = vst [vmem:[%s352 + $0xc] sm:$0xf] %v1124
        %1157 = vst [vmem:[%s352 + $0x10] sm:$0xf] %v1125
        %1158 = vst [vmem:[%s352 + $0x14] sm:$0xf] %v1126
        %1159 = vst [vmem:[%s352 + $0x18] sm:$0xf] %v1127
        %1160 = vst [vmem:[%s352 + $0x1c] sm:$0xf] %v1128
        %1161 = vst [vmem:[%s352 + $0x20] sm:$0xf] %v1129
        %1162 = vst [vmem:[%s352 + $0x24] sm:$0xf] %v1130
        %1163 = vst [vmem:[%s352 + $0x28] sm:$0xf] %v1131
        %1164 = vst [vmem:[%s352 + $0x2c] sm:$0xf] %v1132
        %1165 = vst [vmem:[%s352 + $0x30] sm:$0xf] %v1133
        %1166 = vst [vmem:[%s352 + $0x34] sm:$0xf] %v1134
        %1167 = vst [vmem:[%s352 + $0x38] sm:$0xf] %v1135
        %1168 = vst [vmem:[%s352 + $0x3c] sm:$0xf] %v1136
        %s1169 = sand.u32 %s207, 1
        %s1170 = scalar_lea.sflag [#allocation4], %s1169
        %s1171 = sand.u32 %s207, 1
        %s1172 = smul.addr %s1171, 64
        %s1173 = scalar_lea.vmem [#allocation8], %s1172
        // Predicated region
        $region65: #{tpu_custom_call.1} parent=51 // pred_check
          %p1174 = pneg %p217
        $region66: #{tpu_custom_call.1} parent=51 // pred_check_branch
          %1176 = sbr.rel (%p1174) target = $region68
        $region67: #{tpu_custom_call.1} parent=51 // pred_region
          %s1177 = smul.u32 16, %s26
          %s1179 = ssub.s32 1024, 1024
          %1180 = vsyncadd %s1170, %s1179
          %s1181 = smul.addr %s1177, 64
          %s1182 = scalar_lea.hbm %s8, %s1181
          %s1183 = sshll.u32 %s1173, 4
          %s1184 = int_to_ptr.vmem [resolvable:$true] %s1183
          %1189 = dma.vmem_to_hbm [thread:$0]  %s1184, 1024, %s1182, %s1170, 64, 64, 4
        $region68: #{tpu_custom_call.1} parent=51 // pred_fallthru
          _
      $region52: #{tpu_custom_call.1} parent=5 // pred_fallthru
        _
      %p1190 = scmp.le.s32.totalorder 2, %s21
      // Predicated region
      $region69: #{tpu_custom_call.1} parent=5 // pred_check
        %p1191 = pneg %p1190
      $region70: #{tpu_custom_call.1} parent=5 // pred_check_branch
        %1193 = sbr.rel (%p1191) target = $region72
      $region71: #{tpu_custom_call.1} parent=5 // pred_region
        %s1194 = ssub.s32 %s21, 2
        // Predicated region
        $region73: #{tpu_custom_call.1} parent=71 // pred_check
          %p1195 = pneg %p223
        $region74: #{tpu_custom_call.1} parent=71 // pred_check_branch
          %1197 = sbr.rel (%p1195) target = $region76
        $region75: #{tpu_custom_call.1} parent=71 // pred_region
          %s1198 = sand.u32 %s208, 1
          %s1199 = scalar_lea.sflag [#allocation4], %s1198
          %s1200 = sand.u32 %s208, 1
          %s1201 = smul.addr %s1200, 64
          %s1202 = scalar_lea.vmem [#allocation8], %s1201
          %1203 = dma.done %s1199, 1024
        $region76: #{tpu_custom_call.1} parent=71 // pred_fallthru
          _
      $region72: #{tpu_custom_call.1} parent=5 // pred_fallthru
        _
    $region6: #{tpu_custom_call.1} parent=1 // loop_footer
      %s25 = sadd.s32 1, %s21
    $region7: #{tpu_custom_call.1} parent=1 // loop_footer_branch
      %20 = sbr.rel target = $region3
    $region8: #{tpu_custom_call.1} parent=1 // loop_exit
      _
    %1204 = vsyncpa [#allocation3], 1
    %s1205 = scalar_lea.sflag [#allocation3], 1
    %1206 = vsyncpa %s1205, 1
    %1207 = vsyncpa [#allocation6], 1
    %1208 = vsyncpa [#allocation4], 1
    %s1209 = scalar_lea.sflag [#allocation4], 1
    %1210 = vsyncpa %s1209, 1

// kernel: tpu_custom_call.1
$region0: #{tpu_custom_call.1}
  #allocation0 [shape = 'u32[]', space=smem, size = 0x4, offset = 0x4, fixed_abs, tag = 'smem constant byte address 0x4 - core index']
  #allocation1 [shape = 'u32[144,128]{1,0:T(1,128)}', space=vmem, size = 0x12000, scoped, tag = 'internal scratch']
  %s0 = inlined_call_operand.hbm [shape: bf16[256,128], index: 0, kind: input, shape index: {}]
  %s1 = inlined_call_operand.hbm [shape: bf16[128,128], index: 1, kind: input, shape index: {}]
  %s2 = inlined_call_operand.vmem [shape: f32[1,128], index: 2, kind: input, shape index: {}]
  %s3 = inlined_call_operand.vmem [shape: f32[1,128], index: 3, kind: input, shape index: {}]
  %s4 = inlined_call_operand.vmem [shape: f32[1,128], index: 4, kind: input, shape index: {}]
  %s5 = inlined_call_operand.hbm [shape: bf16[128,128], index: 5, kind: input, shape index: {}]
  %s6 = inlined_call_operand.vmem [shape: f32[1,128], index: 6, kind: input, shape index: {}]
  %s7 = inlined_call_operand.vmem [shape: f32[1,128], index: 7, kind: input, shape index: {}]
  %s8 = inlined_call_operand.hbm [shape: bf16[256,128], index: 8, kind: output, shape index: {}]
  %s9 = sld [smem:[#allocation0]]
  $region77: #{tpu_custom_call.1} parent=0
    _
  %s11 = ssub.s32 1, %s9
  %s12 = scalar_select 0, %s11, %s9
  $region1: #{tpu_custom_call.1} parent=0
    #allocation2 [shape = 'u8[65536]{0}', space=vmem, size = 0x10000, scoped, tag = 'input window, operand 0']
    #allocation3 [shape = 's32[2]{0}', space=sflag, size = 0x8, scoped, tag = 'scoped memory for tpu_custom_call.1']
    #allocation4 [shape = 's32[2]{0}', space=sflag, size = 0x8, scoped, tag = 'scoped memory for tpu_custom_call.1']
    #allocation5 [shape = 'u8[32768]{0}', space=vmem, size = 0x8000, scoped, tag = 'input window, operand 1, single buffered']
    #allocation6 [shape = 's32[1]{0}', space=sflag, size = 0x4, scoped, tag = 'scoped memory for tpu_custom_call.1']
    #allocation7 [shape = 'u8[32768]{0}', space=vmem, size = 0x8000, scoped, tag = 'input window, operand 5, single buffered']
    #allocation8 [shape = 'u8[65536]{0}', space=vmem, size = 0x10000, scoped, tag = 'output window, operand 0']
    %13 = vsyncpa [#allocation3], 0
    %s14 = scalar_lea.sflag [#allocation3], 1
    %15 = vsyncpa %s14, 0
    %16 = vsyncpa [#allocation6], 0
    %17 = vsyncpa [#allocation4], 0
    %s18 = scalar_lea.sflag [#allocation4], 1
    %19 = vsyncpa %s18, 0
    loop: start=0, step=1, limit=4
    $region2: #{tpu_custom_call.1} parent=1 // loop_pre_header
      _
    $region3: #{tpu_custom_call.1} parent=1 // loop_header
      %s21 = sphi 0, %s25
      %p22 = scmp.ge.s32.totalorder %s21, 4
      %s31 = sphi 0, %s33
      %s34 = sphi 0, %s31
      %s35 = sphi 0, %s34
      %s51 = sphi 0, %s35
      %s55 = sphi 0, %s55
      %s57 = sphi 0, %s55
      %s58 = sphi 0, %s57
      %s72 = sphi 0, %s58
      %s76 = sphi 0, %s76
      %s78 = sphi 0, %s76
      %s79 = sphi 0, %s78
      %s93 = sphi 0, %s79
      %s97 = sphi 0, %s97
      %s99 = sphi 0, %s97
      %s100 = sphi 0, %s99
      %s114 = sphi 0, %s100
      %s118 = sphi 0, %s118
      %s120 = sphi 0, %s118
      %s121 = sphi 0, %s120
      %s135 = sphi 0, %s121
      %s139 = sphi 0, %s139
      %s141 = sphi 0, %s139
      %s142 = sphi 0, %s141
      %s156 = sphi 0, %s142
      %s160 = sphi 0, %s160
      %s162 = sphi 0, %s160
      %s163 = sphi 0, %s162
      %s177 = sphi 0, %s163
      %s181 = sphi 0, %s181
      %s183 = sphi 0, %s181
      %s184 = sphi 0, %s183
      %s198 = sphi 0, %s184
      %s204 = sphi 0, %s206
      %s207 = sphi 0, %s204
      %s208 = sphi 0, %s207
      %s224 = sphi 0, %s208
    $region4: #{tpu_custom_call.1} parent=1 // loop_header_branch
      %24 = sbr.rel (%p22) target = $region8
    $region5: #{tpu_custom_call.1} parent=1 // loop_body
      %s26 = ssub.s32 %s21, 1
      %s27 = ssub.s32 %s21, 2
      %s28 = sadd.s32 %s21, 1
      %s29 = ssub.s32 %s21, %s28
      %p30 = scmp.eq.s32.totalorder %s29, 0
      %s32 = sadd.s32 %s31, 1
      %s33 = scalar_select %p30, %s31, %s32
      %p36 = pneg %p30
      %p37 = scmp.eq.s32.totalorder %s21, 1
      %p38 = por %p36, %p37
      %p39 = scmp.ne.s32.totalorder %s31, %s34
      %p40 = scmp.eq.s32.totalorder %s21, 0
      %p41 = por %p39, %p40
      %p42 = scmp.ne.s32.totalorder %s31, %s34
      %p43 = scmp.eq.s32.totalorder %s26, 1
      %p44 = por %p42, %p43
      %p45 = scmp.ne.s32.totalorder %s34, %s35
      %p46 = scmp.eq.s32.totalorder %s26, 0
      %p47 = por %p45, %p46
      %p48 = scmp.ne.s32.totalorder %s34, %s35
      %p49 = scmp.eq.s32.totalorder %s27, 1
      %p50 = por %p48, %p49
      %p52 = scmp.ne.s32.totalorder %s35, %s51
      %p53 = scmp.eq.s32.totalorder %s27, 0
      %p54 = por %p52, %p53
      %s56 = sadd.s32 %s55, 1
      %p59 = scmp.eq.s32.totalorder %s21, 1
      %p60 = scmp.ne.s32.totalorder %s55, %s57
      %p61 = scmp.eq.s32.totalorder %s21, 0
      %p62 = por %p60, %p61
      %p63 = scmp.ne.s32.totalorder %s55, %s57
      %p64 = scmp.eq.s32.totalorder %s26, 1
      %p65 = por %p63, %p64
      %p66 = scmp.ne.s32.totalorder %s57, %s58
      %p67 = scmp.eq.s32.totalorder %s26, 0
      %p68 = por %p66, %p67
      %p69 = scmp.ne.s32.totalorder %s57, %s58
      %p70 = scmp.eq.s32.totalorder %s27, 1
      %p71 = por %p69, %p70
      %p73 = scmp.ne.s32.totalorder %s58, %s72
      %p74 = scmp.eq.s32.totalorder %s27, 0
      %p75 = por %p73, %p74
      %s77 = sadd.s32 %s76, 1
      %p80 = scmp.eq.s32.totalorder %s21, 1
      %p81 = scmp.ne.s32.totalorder %s76, %s78
      %p82 = scmp.eq.s32.totalorder %s21, 0
      %p83 = por %p81, %p82
      %p84 = scmp.ne.s32.totalorder %s76, %s78
      %p85 = scmp.eq.s32.totalorder %s26, 1
      %p86 = por %p84, %p85
      %p87 = scmp.ne.s32.totalorder %s78, %s79
      %p88 = scmp.eq.s32.totalorder %s26, 0
      %p89 = por %p87, %p88
      %p90 = scmp.ne.s32.totalorder %s78, %s79
      %p91 = scmp.eq.s32.totalorder %s27, 1
      %p92 = por %p90, %p91
      %p94 = scmp.ne.s32.totalorder %s79, %s93
      %p95 = scmp.eq.s32.totalorder %s27, 0
      %p96 = por %p94, %p95
      %s98 = sadd.s32 %s97, 1
      %p101 = scmp.eq.s32.totalorder %s21, 1
      %p102 = scmp.ne.s32.totalorder %s97, %s99
      %p103 = scmp.eq.s32.totalorder %s21, 0
      %p104 = por %p102, %p103
      %p105 = scmp.ne.s32.totalorder %s97, %s99
      %p106 = scmp.eq.s32.totalorder %s26, 1
      %p107 = por %p105, %p106
      %p108 = scmp.ne.s32.totalorder %s99, %s100
      %p109 = scmp.eq.s32.totalorder %s26, 0
      %p110 = por %p108, %p109
      %p111 = scmp.ne.s32.totalorder %s99, %s100
      %p112 = scmp.eq.s32.totalorder %s27, 1
      %p113 = por %p111, %p112
      %p115 = scmp.ne.s32.totalorder %s100, %s114
      %p116 = scmp.eq.s32.totalorder %s27, 0
      %p117 = por %p115, %p116
      %s119 = sadd.s32 %s118, 1
      %p122 = scmp.eq.s32.totalorder %s21, 1
      %p123 = scmp.ne.s32.totalorder %s118, %s120
      %p124 = scmp.eq.s32.totalorder %s21, 0
      %p125 = por %p123, %p124
      %p126 = scmp.ne.s32.totalorder %s118, %s120
      %p127 = scmp.eq.s32.totalorder %s26, 1
      %p128 = por %p126, %p127
      %p129 = scmp.ne.s32.totalorder %s120, %s121
      %p130 = scmp.eq.s32.totalorder %s26, 0
      %p131 = por %p129, %p130
      %p132 = scmp.ne.s32.totalorder %s120, %s121
      %p133 = scmp.eq.s32.totalorder %s27, 1
      %p134 = por %p132, %p133
      %p136 = scmp.ne.s32.totalorder %s121, %s135
      %p137 = scmp.eq.s32.totalorder %s27, 0
      %p138 = por %p136, %p137
      %s140 = sadd.s32 %s139, 1
      %p143 = scmp.eq.s32.totalorder %s21, 1
      %p144 = scmp.ne.s32.totalorder %s139, %s141
      %p145 = scmp.eq.s32.totalorder %s21, 0
      %p146 = por %p144, %p145
      %p147 = scmp.ne.s32.totalorder %s139, %s141
      %p148 = scmp.eq.s32.totalorder %s26, 1
      %p149 = por %p147, %p148
      %p150 = scmp.ne.s32.totalorder %s141, %s142
      %p151 = scmp.eq.s32.totalorder %s26, 0
      %p152 = por %p150, %p151
      %p153 = scmp.ne.s32.totalorder %s141, %s142
      %p154 = scmp.eq.s32.totalorder %s27, 1
      %p155 = por %p153, %p154
      %p157 = scmp.ne.s32.totalorder %s142, %s156
      %p158 = scmp.eq.s32.totalorder %s27, 0
      %p159 = por %p157, %p158
      %s161 = sadd.s32 %s160, 1
      %p164 = scmp.eq.s32.totalorder %s21, 1
      %p165 = scmp.ne.s32.totalorder %s160, %s162
      %p166 = scmp.eq.s32.totalorder %s21, 0
      %p167 = por %p165, %p166
      %p168 = scmp.ne.s32.totalorder %s160, %s162
      %p169 = scmp.eq.s32.totalorder %s26, 1
      %p170 = por %p168, %p169
      %p171 = scmp.ne.s32.totalorder %s162, %s163
      %p172 = scmp.eq.s32.totalorder %s26, 0
      %p173 = por %p171, %p172
      %p174 = scmp.ne.s32.totalorder %s162, %s163
      %p175 = scmp.eq.s32.totalorder %s27, 1
      %p176 = por %p174, %p175
      %p178 = scmp.ne.s32.totalorder %s163, %s177
      %p179 = scmp.eq.s32.totalorder %s27, 0
      %p180 = por %p178, %p179
      %s182 = sadd.s32 %s181, 1
      %p185 = scmp.eq.s32.totalorder %s21, 1
      %p186 = scmp.ne.s32.totalorder %s181, %s183
      %p187 = scmp.eq.s32.totalorder %s21, 0
      %p188 = por %p186, %p187
      %p189 = scmp.ne.s32.totalorder %s181, %s183
      %p190 = scmp.eq.s32.totalorder %s26, 1
      %p191 = por %p189, %p190
      %p192 = scmp.ne.s32.totalorder %s183, %s184
      %p193 = scmp.eq.s32.totalorder %s26, 0
      %p194 = por %p192, %p193
      %p195 = scmp.ne.s32.totalorder %s183, %s184
      %p196 = scmp.eq.s32.totalorder %s27, 1
      %p197 = por %p195, %p196
      %p199 = scmp.ne.s32.totalorder %s184, %s198
      %p200 = scmp.eq.s32.totalorder %s27, 0
      %p201 = por %p199, %p200
      %s202 = ssub.s32 %s21, %s28
      %p203 = scmp.eq.s32.totalorder %s202, 0
      %s205 = sadd.s32 %s204, 1
      %s206 = scalar_select %p203, %s204, %s205
      %p209 = pneg %p203
      %p210 = scmp.eq.s32.totalorder %s21, 1
      %p211 = por %p209, %p210
      %p212 = scmp.ne.s32.totalorder %s204, %s207
      %p213 = scmp.eq.s32.totalorder %s21, 0
      %p214 = por %p212, %p213
      %p215 = scmp.ne.s32.totalorder %s204, %s207
      %p216 = scmp.eq.s32.totalorder %s26, 1
      %p217 = por %p215, %p216
      %p218 = scmp.ne.s32.totalorder %s207, %s208
      %p219 = scmp.eq.s32.totalorder %s26, 0
      %p220 = por %p218, %p219
      %p221 = scmp.ne.s32.totalorder %s207, %s208
      %p222 = scmp.eq.s32.totalorder %s27, 1
      %p223 = por %p221, %p222
      %p225 = scmp.ne.s32.totalorder %s208, %s224
      %p226 = scmp.eq.s32.totalorder %s27, 0
      %p227 = por %p225, %p226
      %p228 = scmp.le.s32.totalorder 1, %s21
      %p229 = scmp.lt.s32.totalorder %s21, 3
      %p230 = pnand %p228, %p229
      %p231 = pneg %p230
      // Predicated region
      $region9: #{tpu_custom_call.1} parent=5 // pred_check
        _
      $region10: #{tpu_custom_call.1} parent=5 // pred_check_branch
        %233 = sbr.rel (%p230) target = $region12
      $region11: #{tpu_custom_call.1} parent=5 // pred_region
        %s234 = ssub.s32 %s21, 1
        // Predicated region
        $region13: #{tpu_custom_call.1} parent=11 // pred_check
          %p235 = pneg %p68
        $region14: #{tpu_custom_call.1} parent=11 // pred_check_branch
          %237 = sbr.rel (%p235) target = $region16
        $region15: #{tpu_custom_call.1} parent=11 // pred_region
          %s239 = ssub.s32 1024, 1024
          %240 = vsyncadd [#allocation6], %s239
          %s241 = sshll.u32 [#allocation5], 4
          %s242 = int_to_ptr.vmem [resolvable:$true] %s241
          %247 = dma.hbm_to_vmem [thread:$0]  %s1, 1024, %s242, [#allocation6], 64, 64, 4
        $region16: #{tpu_custom_call.1} parent=11 // pred_fallthru
          _
        // Predicated region
        $region17: #{tpu_custom_call.1} parent=11 // pred_check
          %p248 = pneg %p89
        $region18: #{tpu_custom_call.1} parent=11 // pred_check_branch
          %250 = sbr.rel (%p248) target = $region20
        $region19: #{tpu_custom_call.1} parent=11 // pred_region
          _
        $region20: #{tpu_custom_call.1} parent=11 // pred_fallthru
          _
        // Predicated region
        $region21: #{tpu_custom_call.1} parent=11 // pred_check
          %p251 = pneg %p110
        $region22: #{tpu_custom_call.1} parent=11 // pred_check_branch
          %253 = sbr.rel (%p251) target = $region24
        $region23: #{tpu_custom_call.1} parent=11 // pred_region
          _
        $region24: #{tpu_custom_call.1} parent=11 // pred_fallthru
          _
        // Predicated region
        $region25: #{tpu_custom_call.1} parent=11 // pred_check
          %p254 = pneg %p131
        $region26: #{tpu_custom_call.1} parent=11 // pred_check_branch
          %256 = sbr.rel (%p254) target = $region28
        $region27: #{tpu_custom_call.1} parent=11 // pred_region
          _
        $region28: #{tpu_custom_call.1} parent=11 // pred_fallthru
          _
        // Predicated region
        $region29: #{tpu_custom_call.1} parent=11 // pred_check
          %p257 = pneg %p152
        $region30: #{tpu_custom_call.1} parent=11 // pred_check_branch
          %259 = sbr.rel (%p257) target = $region32
        $region31: #{tpu_custom_call.1} parent=11 // pred_region
          %s261 = ssub.s32 1024, 1024
          %262 = vsyncadd [#allocation6], %s261
          %s263 = sshll.u32 [#allocation7], 4
          %s264 = int_to_ptr.vmem [resolvable:$true] %s263
          %269 = dma.hbm_to_vmem [thread:$0]  %s5, 1024, %s264, [#allocation6], 64, 64, 4
        $region32: #{tpu_custom_call.1} parent=11 // pred_fallthru
          _
        // Predicated region
        $region33: #{tpu_custom_call.1} parent=11 // pred_check
          %p270 = pneg %p173
        $region34: #{tpu_custom_call.1} parent=11 // pred_check_branch
          %272 = sbr.rel (%p270) target = $region36
        $region35: #{tpu_custom_call.1} parent=11 // pred_region
          _
        $region36: #{tpu_custom_call.1} parent=11 // pred_fallthru
          _
        // Predicated region
        $region37: #{tpu_custom_call.1} parent=11 // pred_check
          %p273 = pneg %p194
        $region38: #{tpu_custom_call.1} parent=11 // pred_check_branch
          %275 = sbr.rel (%p273) target = $region40
        $region39: #{tpu_custom_call.1} parent=11 // pred_region
          _
        $region40: #{tpu_custom_call.1} parent=11 // pred_fallthru
          _
      $region12: #{tpu_custom_call.1} parent=5 // pred_fallthru
        _
      %p276 = scmp.lt.s32.totalorder %s21, 2
      // Predicated region
      $region41: #{tpu_custom_call.1} parent=5 // pred_check
        %p277 = pneg %p276
      $region42: #{tpu_custom_call.1} parent=5 // pred_check_branch
        %279 = sbr.rel (%p277) target = $region44
      $region43: #{tpu_custom_call.1} parent=5 // pred_region
        // Predicated region
        $region45: #{tpu_custom_call.1} parent=43 // pred_check
          %p280 = pneg %p41
        $region46: #{tpu_custom_call.1} parent=43 // pred_check_branch
          %282 = sbr.rel (%p280) target = $region48
        $region47: #{tpu_custom_call.1} parent=43 // pred_region
          %s283 = sand.u32 %s31, 1
          %s284 = scalar_lea.sflag [#allocation3], %s283
          %s285 = sand.u32 %s31, 1
          %s286 = smul.addr %s285, 64
          %s287 = scalar_lea.vmem [#allocation2], %s286
          %s288 = smul.u32 16, %s21
          %s290 = ssub.s32 1024, 1024
          %291 = vsyncadd %s284, %s290
          %s292 = smul.addr %s288, 64
          %s293 = scalar_lea.hbm %s0, %s292
          %s294 = sshll.u32 %s287, 4
          %s295 = int_to_ptr.vmem [resolvable:$true] %s294
          %300 = dma.hbm_to_vmem [thread:$0]  %s293, 1024, %s295, %s284, 64, 64, 4
        $region48: #{tpu_custom_call.1} parent=43 // pred_fallthru
          _
      $region44: #{tpu_custom_call.1} parent=5 // pred_fallthru
        _
      %p301 = scmp.le.s32.totalorder 1, %s21
      %p302 = scmp.lt.s32.totalorder %s21, 3
      %p303 = pnand %p301, %p302
      %p304 = pneg %p303
      // Predicated region
      $region49: #{tpu_custom_call.1} parent=5 // pred_check
        _
      $region50: #{tpu_custom_call.1} parent=5 // pred_check_branch
        %306 = sbr.rel (%p303) target = $region52
      $region51: #{tpu_custom_call.1} parent=5 // pred_region
        %s307 = ssub.s32 %s21, 1
        %s308 = sand.u32 %s34, 1
        %s309 = scalar_lea.sflag [#allocation3], %s308
        %s310 = sand.u32 %s34, 1
        %s311 = smul.addr %s310, 64
        %s312 = scalar_lea.vmem [#allocation2], %s311
        // Predicated region
        $region53: #{tpu_custom_call.1} parent=51 // pred_check
          %p313 = pneg %p47
        $region54: #{tpu_custom_call.1} parent=51 // pred_check_branch
          %315 = sbr.rel (%p313) target = $region56
        $region55: #{tpu_custom_call.1} parent=51 // pred_region
          %316 = dma.done %s309, 1024
        $region56: #{tpu_custom_call.1} parent=51 // pred_fallthru
          _
        // Predicated region
        $region57: #{tpu_custom_call.1} parent=51 // pred_check
          %p317 = pneg %p68
        $region58: #{tpu_custom_call.1} parent=51 // pred_check_branch
          %319 = sbr.rel (%p317) target = $region60
        $region59: #{tpu_custom_call.1} parent=51 // pred_region
          %320 = dma.done [#allocation6], 1024
        $region60: #{tpu_custom_call.1} parent=51 // pred_fallthru
          _
        // Predicated region
        $region61: #{tpu_custom_call.1} parent=51 // pred_check
          %p321 = pneg %p152
        $region62: #{tpu_custom_call.1} parent=51 // pred_check_branch
          %323 = sbr.rel (%p321) target = $region64
        $region63: #{tpu_custom_call.1} parent=51 // pred_region
          %324 = dma.done [#allocation6], 1024
        $region64: #{tpu_custom_call.1} parent=51 // pred_fallthru
          _
        %s325 = sand.u32 %s34, 1
        %s326 = scalar_lea.sflag [#allocation3], %s325
        %s327 = sand.u32 %s34, 1
        %s328 = smul.addr %s327, 64
        %s329 = scalar_lea.vmem [#allocation2], %s328
        %p330 = pneg %p47
        %p331 = pneg %p44
        %p332 = pneg %p68
        %p333 = pneg %p65
        %p334 = pneg %p89
        %p335 = pneg %p86
        %p336 = pneg %p110
        %p337 = pneg %p107
        %p338 = pneg %p131
        %p339 = pneg %p128
        %p340 = pneg %p152
        %p341 = pneg %p149
        %p342 = pneg %p173
        %p343 = pneg %p170
        %p344 = pneg %p194
        %p345 = pneg %p191
        %p346 = pneg %p220
        %p347 = pneg %p217
        %s348 = sand.u32 %s207, 1
        %s349 = scalar_lea.sflag [#allocation4], %s348
        %s350 = sand.u32 %s207, 1
        %s351 = smul.addr %s350, 64
        %s352 = scalar_lea.vmem [#allocation8], %s351
        %s353 = smul.u32 16, %s26
        %s354 = smul.u32 16, %s26
        %v356 = vld [vmem:[%s312] sm:$0xf]
        %v357 = vld [vmem:[%s312 + $0x4] sm:$0xf]
        %v358 = vld [vmem:[%s312 + $0x8] sm:$0xf]
        %v359 = vld [vmem:[%s312 + $0xc] sm:$0xf]
        %v360 = vld [vmem:[%s312 + $0x10] sm:$0xf]
        %v361 = vld [vmem:[%s312 + $0x14] sm:$0xf]
        %v362 = vld [vmem:[%s312 + $0x18] sm:$0xf]
        %v363 = vld [vmem:[%s312 + $0x1c] sm:$0xf]
        %v364 = vld [vmem:[%s312 + $0x20] sm:$0xf]
        %v365 = vld [vmem:[%s312 + $0x24] sm:$0xf]
        %v366 = vld [vmem:[%s312 + $0x28] sm:$0xf]
        %v367 = vld [vmem:[%s312 + $0x2c] sm:$0xf]
        %v368 = vld [vmem:[%s312 + $0x30] sm:$0xf]
        %v369 = vld [vmem:[%s312 + $0x34] sm:$0xf]
        %v370 = vld [vmem:[%s312 + $0x38] sm:$0xf]
        %v371 = vld [vmem:[%s312 + $0x3c] sm:$0xf]
        %v372 = vld [vmem:[#allocation5] sm:$0xf]
        %v373 = vld [vmem:[#allocation5 + $0x4] sm:$0xf]
        %v374 = vld [vmem:[#allocation5 + $0x8] sm:$0xf]
        %v375 = vld [vmem:[#allocation5 + $0xc] sm:$0xf]
        %v376 = vld [vmem:[#allocation5 + $0x10] sm:$0xf]
        %v377 = vld [vmem:[#allocation5 + $0x14] sm:$0xf]
        %v378 = vld [vmem:[#allocation5 + $0x18] sm:$0xf]
        %v379 = vld [vmem:[#allocation5 + $0x1c] sm:$0xf]
        %v380 = vld [vmem:[#allocation5 + $0x20] sm:$0xf]
        %v381 = vld [vmem:[#allocation5 + $0x24] sm:$0xf]
        %v382 = vld [vmem:[#allocation5 + $0x28] sm:$0xf]
        %v383 = vld [vmem:[#allocation5 + $0x2c] sm:$0xf]
        %v384 = vld [vmem:[#allocation5 + $0x30] sm:$0xf]
        %v385 = vld [vmem:[#allocation5 + $0x34] sm:$0xf]
        %v386 = vld [vmem:[#allocation5 + $0x38] sm:$0xf]
        %v387 = vld [vmem:[#allocation5 + $0x3c] sm:$0xf]
        %v388 = vld [vmem:[%s2] sm:$0x1]
        %v390 = vlaneseq
        %v391 = vshrl.u32 %v390, 7
        %v392 = vsub.s32 0, %v391
        %v393 = vrot.slane %v388, %v392
        %v411 = vunpack.c.l.b16 %v356
        %v412 = vunpack.c.l.b16 %v357
        %v413 = vunpack.c.l.b16 %v358
        %v414 = vunpack.c.l.b16 %v359
        %v415 = vunpack.c.l.b16 %v360
        %v416 = vunpack.c.l.b16 %v361
        %v417 = vunpack.c.l.b16 %v362
        %v418 = vunpack.c.l.b16 %v363
        %v419 = vunpack.c.l.b16 %v364
        %v420 = vunpack.c.l.b16 %v365
        %v421 = vunpack.c.l.b16 %v366
        %v422 = vunpack.c.l.b16 %v367
        %v423 = vunpack.c.l.b16 %v368
        %v424 = vunpack.c.l.b16 %v369
        %v425 = vunpack.c.l.b16 %v370
        %v426 = vunpack.c.l.b16 %v371
        %v427 = vpack.c.b16 %v412, %v411
        %v428 = vpack.c.b16 %v414, %v413
        %v429 = vpack.c.b16 %v416, %v415
        %v430 = vpack.c.b16 %v418, %v417
        %v431 = vpack.c.b16 %v420, %v419
        %v432 = vpack.c.b16 %v422, %v421
        %v433 = vpack.c.b16 %v424, %v423
        %v434 = vpack.c.b16 %v426, %v425
        %v459 = vunpack.c.l.b16 %v372
        %v460 = vunpack.c.l.b16 %v373
        %v461 = vunpack.c.l.b16 %v374
        %v462 = vunpack.c.l.b16 %v375
        %v463 = vunpack.c.l.b16 %v376
        %v464 = vunpack.c.l.b16 %v377
        %v465 = vunpack.c.l.b16 %v378
        %v466 = vunpack.c.l.b16 %v379
        %v467 = vunpack.c.l.b16 %v380
        %v468 = vunpack.c.l.b16 %v381
        %v469 = vunpack.c.l.b16 %v382
        %v470 = vunpack.c.l.b16 %v383
        %v471 = vunpack.c.l.b16 %v384
        %v472 = vunpack.c.l.b16 %v385
        %v473 = vunpack.c.l.b16 %v386
        %v474 = vunpack.c.l.b16 %v387
        %v475 = vpack.c.b16 %v460, %v459
        %v476 = vpack.c.b16 %v462, %v461
        %v477 = vpack.c.b16 %v464, %v463
        %v478 = vpack.c.b16 %v466, %v465
        %v479 = vpack.c.b16 %v468, %v467
        %v480 = vpack.c.b16 %v470, %v469
        %v481 = vpack.c.b16 %v472, %v471
        %v482 = vpack.c.b16 %v474, %v473
        %491 = vmatprep.subr.bf16.mxu0 0
        %492 = vmatpush1.bf16.msra.mxu0 %v475
        %493 = vmatprep.subr.bf16.mxu0 0
        %494 = vmatpush1.bf16.msra.mxu0 %v476
        %495 = vmatprep.subr.bf16.mxu0 0
        %496 = vmatpush1.bf16.msra.mxu0 %v477
        %497 = vmatprep.subr.bf16.mxu0 0
        %498 = vmatpush1.bf16.msra.mxu0 %v478
        %499 = vmatprep.subr.bf16.mxu0 0
        %500 = vmatpush1.bf16.msra.mxu0 %v479
        %501 = vmatprep.subr.bf16.mxu0 0
        %502 = vmatpush1.bf16.msra.mxu0 %v480
        %503 = vmatprep.subr.bf16.mxu0 0
        %504 = vmatpush1.bf16.msra.mxu0 %v481
        %505 = vmatprep.subr.bf16.mxu0 0
        %506 = vmatpush1.bf16.msra.mxu0 %v482
        %507 = vmatprep.subr.bf16.mxu0 0
        %508 = vmatpush1.bf16.msra.mxu0 0
        %509 = vmatprep.subr.bf16.mxu0 0
        %510 = vmatpush1.bf16.msra.mxu0 0
        %511 = vmatprep.subr.bf16.mxu0 0
        %512 = vmatpush1.bf16.msra.mxu0 0
        %513 = vmatprep.subr.bf16.mxu0 0
        %514 = vmatpush1.bf16.msra.mxu0 0
        %515 = vmatprep.subr.bf16.mxu0 0
        %516 = vmatpush1.bf16.msra.mxu0 0
        %517 = vmatprep.subr.bf16.mxu0 0
        %518 = vmatpush1.bf16.msra.mxu0 0
        %519 = vmatprep.subr.bf16.mxu0 0
        %520 = vmatpush1.bf16.msra.mxu0 0
        %521 = vmatprep.subr.bf16.mxu0 0
        %522 = vmatpush1.bf16.msra.mxu0 0
        %523 = vmatprep.mubr.bf16.mxu0 0
        %524 = vmatmul.mubr.bf16.gmra.mrb[0].mxu0 %v427
        %v525 = vpop.f32.mrb[0].mxu0
        %v526 = vadd.f32 %v393, %v525
        %v527 = vpop.f32.mrb[0].mxu0
        %v528 = vpop.f32.mrb[0].mxu0
        %v529 = vadd.f32 %v393, %v528
        %v530 = vpop.f32.mrb[0].mxu0
        %531 = vmatprep.mubr.bf16.mxu0 0
        %532 = vmatmul.mubr.bf16.gmra.mrb[0].mxu0 %v428
        %v533 = vpop.f32.mrb[0].mxu0
        %v534 = vadd.f32 %v393, %v533
        %v535 = vpop.f32.mrb[0].mxu0
        %v536 = vpop.f32.mrb[0].mxu0
        %v537 = vadd.f32 %v393, %v536
        %v538 = vpop.f32.mrb[0].mxu0
        %539 = vmatprep.mubr.bf16.mxu0 0
        %540 = vmatmul.mubr.bf16.gmra.mrb[0].mxu0 %v429
        %v541 = vpop.f32.mrb[0].mxu0
        %v542 = vadd.f32 %v393, %v541
        %v543 = vpop.f32.mrb[0].mxu0
        %v544 = vpop.f32.mrb[0].mxu0
        %v545 = vadd.f32 %v393, %v544
        %v546 = vpop.f32.mrb[0].mxu0
        %547 = vmatprep.mubr.bf16.mxu0 0
        %548 = vmatmul.mubr.bf16.gmra.mrb[0].mxu0 %v430
        %v549 = vpop.f32.mrb[0].mxu0
        %v550 = vadd.f32 %v393, %v549
        %v551 = vpop.f32.mrb[0].mxu0
        %v552 = vpop.f32.mrb[0].mxu0
        %v553 = vadd.f32 %v393, %v552
        %v554 = vpop.f32.mrb[0].mxu0
        %555 = vmatprep.mubr.bf16.mxu0 0
        %556 = vmatmul.mubr.bf16.gmra.mrb[0].mxu0 %v431
        %v557 = vpop.f32.mrb[0].mxu0
        %v558 = vadd.f32 %v393, %v557
        %v559 = vpop.f32.mrb[0].mxu0
        %v560 = vpop.f32.mrb[0].mxu0
        %v561 = vadd.f32 %v393, %v560
        %v562 = vpop.f32.mrb[0].mxu0
        %563 = vmatprep.mubr.bf16.mxu0 0
        %564 = vmatmul.mubr.bf16.gmra.mrb[0].mxu0 %v432
        %v565 = vpop.f32.mrb[0].mxu0
        %v566 = vadd.f32 %v393, %v565
        %v567 = vpop.f32.mrb[0].mxu0
        %v568 = vpop.f32.mrb[0].mxu0
        %v569 = vadd.f32 %v393, %v568
        %v570 = vpop.f32.mrb[0].mxu0
        %571 = vmatprep.mubr.bf16.mxu0 0
        %572 = vmatmul.mubr.bf16.gmra.mrb[0].mxu0 %v433
        %v573 = vpop.f32.mrb[0].mxu0
        %v574 = vadd.f32 %v393, %v573
        %v575 = vpop.f32.mrb[0].mxu0
        %v576 = vpop.f32.mrb[0].mxu0
        %v577 = vadd.f32 %v393, %v576
        %v578 = vpop.f32.mrb[0].mxu0
        %579 = vmatprep.mubr.bf16.mxu0 0
        %580 = vmatmul.mubr.bf16.gmra.mrb[0].mxu0 %v434
        %v581 = vpop.f32.mrb[0].mxu0
        %v582 = vadd.f32 %v393, %v581
        %v583 = vpop.f32.mrb[0].mxu0
        %v584 = vpop.f32.mrb[0].mxu0
        %v585 = vadd.f32 %v393, %v584
        %v586 = vpop.f32.mrb[0].mxu0
        %587 = vdwg.mxu0
        %v588 = vmul.f32 %v526, 0.5
        %v589 = vmul.f32 %v529, 0.5
        %v590 = vmul.f32 %v534, 0.5
        %v591 = vmul.f32 %v537, 0.5
        %v592 = vmul.f32 %v542, 0.5
        %v593 = vmul.f32 %v545, 0.5
        %v594 = vmul.f32 %v550, 0.5
        %v595 = vmul.f32 %v553, 0.5
        %v596 = vmul.f32 %v558, 0.5
        %v597 = vmul.f32 %v561, 0.5
        %v598 = vmul.f32 %v566, 0.5
        %v599 = vmul.f32 %v569, 0.5
        %v600 = vmul.f32 %v574, 0.5
        %v601 = vmul.f32 %v577, 0.5
        %v602 = vmul.f32 %v582, 0.5
        %v603 = vmul.f32 %v585, 0.5
        %v604 = vmul.f32 %v526, 0.70710677
        %v605 = vmul.f32 %v529, 0.70710677
        %v606 = vmul.f32 %v534, 0.70710677
        %v607 = vmul.f32 %v537, 0.70710677
        %v608 = vmul.f32 %v542, 0.70710677
        %v609 = vmul.f32 %v545, 0.70710677
        %v610 = vmul.f32 %v550, 0.70710677
        %v611 = vmul.f32 %v553, 0.70710677
        %v612 = vmul.f32 %v558, 0.70710677
        %v613 = vmul.f32 %v561, 0.70710677
        %v614 = vmul.f32 %v566, 0.70710677
        %v615 = vmul.f32 %v569, 0.70710677
        %v616 = vmul.f32 %v574, 0.70710677
        %v617 = vmul.f32 %v577, 0.70710677
        %v618 = vmul.f32 %v582, 0.70710677
        %v619 = vmul.f32 %v585, 0.70710677
        %v620 = verf.f32.pop %v604
        %v621 = verf.f32.pop %v605
        %v622 = verf.f32.pop %v606
        %v623 = verf.f32.pop %v607
        %v624 = verf.f32.pop %v608
        %v625 = verf.f32.pop %v609
        %v626 = verf.f32.pop %v610
        %v627 = verf.f32.pop %v611
        %v628 = verf.f32.pop %v612
        %v629 = verf.f32.pop %v613
        %v630 = verf.f32.pop %v614
        %v631 = verf.f32.pop %v615
        %v632 = verf.f32.pop %v616
        %v633 = verf.f32.pop %v617
        %v634 = verf.f32.pop %v618
        %v635 = verf.f32.pop %v619
        %v636 = vadd.f32 %v620, 1.0
        %v637 = vadd.f32 %v621, 1.0
        %v638 = vadd.f32 %v622, 1.0
        %v639 = vadd.f32 %v623, 1.0
        %v640 = vadd.f32 %v624, 1.0
        %v641 = vadd.f32 %v625, 1.0
        %v642 = vadd.f32 %v626, 1.0
        %v643 = vadd.f32 %v627, 1.0
        %v644 = vadd.f32 %v628, 1.0
        %v645 = vadd.f32 %v629, 1.0
        %v646 = vadd.f32 %v630, 1.0
        %v647 = vadd.f32 %v631, 1.0
        %v648 = vadd.f32 %v632, 1.0
        %v649 = vadd.f32 %v633, 1.0
        %v650 = vadd.f32 %v634, 1.0
        %v651 = vadd.f32 %v635, 1.0
        %v652 = vmul.f32 %v588, %v636
        %v653 = vmul.f32 %v589, %v637
        %v654 = vmul.f32 %v590, %v638
        %v655 = vmul.f32 %v591, %v639
        %v656 = vmul.f32 %v592, %v640
        %v657 = vmul.f32 %v593, %v641
        %v658 = vmul.f32 %v594, %v642
        %v659 = vmul.f32 %v595, %v643
        %v660 = vmul.f32 %v596, %v644
        %v661 = vmul.f32 %v597, %v645
        %v662 = vmul.f32 %v598, %v646
        %v663 = vmul.f32 %v599, %v647
        %v664 = vmul.f32 %v600, %v648
        %v665 = vmul.f32 %v601, %v649
        %v666 = vmul.f32 %v602, %v650
        %v667 = vmul.f32 %v603, %v651
        %668 = vadd.xlane.f32.xlu0 %v652
        %v669 = vpop.xlane.xlu0 %668
        %670 = vadd.xlane.f32.xlu0 %v653
        %v671 = vpop.xlane.xlu0 %670
        %672 = vadd.xlane.f32.xlu0 %v654
        %v673 = vpop.xlane.xlu0 %672
        %674 = vadd.xlane.f32.xlu0 %v655
        %v675 = vpop.xlane.xlu0 %674
        %676 = vadd.xlane.f32.xlu0 %v656
        %v677 = vpop.xlane.xlu0 %676
        %678 = vadd.xlane.f32.xlu0 %v657
        %v679 = vpop.xlane.xlu0 %678
        %680 = vadd.xlane.f32.xlu0 %v658
        %v681 = vpop.xlane.xlu0 %680
        %682 = vadd.xlane.f32.xlu0 %v659
        %v683 = vpop.xlane.xlu0 %682
        %684 = vadd.xlane.f32.xlu0 %v660
        %v685 = vpop.xlane.xlu0 %684
        %686 = vadd.xlane.f32.xlu0 %v661
        %v687 = vpop.xlane.xlu0 %686
        %688 = vadd.xlane.f32.xlu0 %v662
        %v689 = vpop.xlane.xlu0 %688
        %690 = vadd.xlane.f32.xlu0 %v663
        %v691 = vpop.xlane.xlu0 %690
        %692 = vadd.xlane.f32.xlu0 %v664
        %v693 = vpop.xlane.xlu0 %692
        %694 = vadd.xlane.f32.xlu0 %v665
        %v695 = vpop.xlane.xlu0 %694
        %696 = vadd.xlane.f32.xlu0 %v666
        %v697 = vpop.xlane.xlu0 %696
        %698 = vadd.xlane.f32.xlu0 %v667
        %v699 = vpop.xlane.xlu0 %698
        %v700 = vmul.f32 %v669, 0.015625
        %v701 = vmul.f32 %v671, 0.015625
        %v702 = vmul.f32 %v673, 0.015625
        %v703 = vmul.f32 %v675, 0.015625
        %v704 = vmul.f32 %v677, 0.015625
        %v705 = vmul.f32 %v679, 0.015625
        %v706 = vmul.f32 %v681, 0.015625
        %v707 = vmul.f32 %v683, 0.015625
        %v708 = vmul.f32 %v685, 0.015625
        %v709 = vmul.f32 %v687, 0.015625
        %v710 = vmul.f32 %v689, 0.015625
        %v711 = vmul.f32 %v691, 0.015625
        %v712 = vmul.f32 %v693, 0.015625
        %v713 = vmul.f32 %v695, 0.015625
        %v714 = vmul.f32 %v697, 0.015625
        %v715 = vmul.f32 %v699, 0.015625
        %v716 = vsub.f32 %v652, %v700
        %v717 = vsub.f32 %v653, %v701
        %v718 = vsub.f32 %v654, %v702
        %v719 = vsub.f32 %v655, %v703
        %v720 = vsub.f32 %v656, %v704
        %v721 = vsub.f32 %v657, %v705
        %v722 = vsub.f32 %v658, %v706
        %v723 = vsub.f32 %v659, %v707
        %v724 = vsub.f32 %v660, %v708
        %v725 = vsub.f32 %v661, %v709
        %v726 = vsub.f32 %v662, %v710
        %v727 = vsub.f32 %v663, %v711
        %v728 = vsub.f32 %v664, %v712
        %v729 = vsub.f32 %v665, %v713
        %v730 = vsub.f32 %v666, %v714
        %v731 = vsub.f32 %v667, %v715
        %v732 = vld [vmem:[%s7] sm:$0x1]
        %v734 = vlaneseq
        %v735 = vshrl.u32 %v734, 7
        %v736 = vsub.s32 0, %v735
        %v737 = vrot.slane %v732, %v736
        %v739 = vmul.f32 %v716, %v737
        %v740 = vmul.f32 %v717, %v737
        %v741 = vmul.f32 %v718, %v737
        %v742 = vmul.f32 %v719, %v737
        %v743 = vmul.f32 %v720, %v737
        %v744 = vmul.f32 %v721, %v737
        %v745 = vmul.f32 %v722, %v737
        %v746 = vmul.f32 %v723, %v737
        %v747 = vmul.f32 %v724, %v737
        %v748 = vmul.f32 %v725, %v737
        %v749 = vmul.f32 %v726, %v737
        %v750 = vmul.f32 %v727, %v737
        %v751 = vmul.f32 %v728, %v737
        %v752 = vmul.f32 %v729, %v737
        %v753 = vmul.f32 %v730, %v737
        %v754 = vmul.f32 %v731, %v737
        %v755 = vmul.f32 %v739, %v739
        %v756 = vmul.f32 %v740, %v740
        %v757 = vmul.f32 %v741, %v741
        %v758 = vmul.f32 %v742, %v742
        %v759 = vmul.f32 %v743, %v743
        %v760 = vmul.f32 %v744, %v744
        %v761 = vmul.f32 %v745, %v745
        %v762 = vmul.f32 %v746, %v746
        %v763 = vmul.f32 %v747, %v747
        %v764 = vmul.f32 %v748, %v748
        %v765 = vmul.f32 %v749, %v749
        %v766 = vmul.f32 %v750, %v750
        %v767 = vmul.f32 %v751, %v751
        %v768 = vmul.f32 %v752, %v752
        %v769 = vmul.f32 %v753, %v753
        %v770 = vmul.f32 %v754, %v754
        %771 = vadd.xlane.f32.xlu0 %v755
        %v772 = vpop.xlane.xlu0 %771
        %773 = vadd.xlane.f32.xlu0 %v756
        %v774 = vpop.xlane.xlu0 %773
        %775 = vadd.xlane.f32.xlu0 %v757
        %v776 = vpop.xlane.xlu0 %775
        %777 = vadd.xlane.f32.xlu0 %v758
        %v778 = vpop.xlane.xlu0 %777
        %779 = vadd.xlane.f32.xlu0 %v759
        %v780 = vpop.xlane.xlu0 %779
        %781 = vadd.xlane.f32.xlu0 %v760
        %v782 = vpop.xlane.xlu0 %781
        %783 = vadd.xlane.f32.xlu0 %v761
        %v784 = vpop.xlane.xlu0 %783
        %785 = vadd.xlane.f32.xlu0 %v762
        %v786 = vpop.xlane.xlu0 %785
        %787 = vadd.xlane.f32.xlu0 %v763
        %v788 = vpop.xlane.xlu0 %787
        %789 = vadd.xlane.f32.xlu0 %v764
        %v790 = vpop.xlane.xlu0 %789
        %791 = vadd.xlane.f32.xlu0 %v765
        %v792 = vpop.xlane.xlu0 %791
        %793 = vadd.xlane.f32.xlu0 %v766
        %v794 = vpop.xlane.xlu0 %793
        %795 = vadd.xlane.f32.xlu0 %v767
        %v796 = vpop.xlane.xlu0 %795
        %797 = vadd.xlane.f32.xlu0 %v768
        %v798 = vpop.xlane.xlu0 %797
        %799 = vadd.xlane.f32.xlu0 %v769
        %v800 = vpop.xlane.xlu0 %799
        %801 = vadd.xlane.f32.xlu0 %v770
        %v802 = vpop.xlane.xlu0 %801
        %v803 = vmul.f32 %v772, 0.015625
        %v804 = vmul.f32 %v774, 0.015625
        %v805 = vmul.f32 %v776, 0.015625
        %v806 = vmul.f32 %v778, 0.015625
        %v807 = vmul.f32 %v780, 0.015625
        %v808 = vmul.f32 %v782, 0.015625
        %v809 = vmul.f32 %v784, 0.015625
        %v810 = vmul.f32 %v786, 0.015625
        %v811 = vmul.f32 %v788, 0.015625
        %v812 = vmul.f32 %v790, 0.015625
        %v813 = vmul.f32 %v792, 0.015625
        %v814 = vmul.f32 %v794, 0.015625
        %v815 = vmul.f32 %v796, 0.015625
        %v816 = vmul.f32 %v798, 0.015625
        %v817 = vmul.f32 %v800, 0.015625
        %v818 = vmul.f32 %v802, 0.015625
        %v819 = vadd.f32 %v803, 1e-05
        %v820 = vadd.f32 %v804, 1e-05
        %v821 = vadd.f32 %v805, 1e-05
        %v822 = vadd.f32 %v806, 1e-05
        %v823 = vadd.f32 %v807, 1e-05
        %v824 = vadd.f32 %v808, 1e-05
        %v825 = vadd.f32 %v809, 1e-05
        %v826 = vadd.f32 %v810, 1e-05
        %v827 = vadd.f32 %v811, 1e-05
        %v828 = vadd.f32 %v812, 1e-05
        %v829 = vadd.f32 %v813, 1e-05
        %v830 = vadd.f32 %v814, 1e-05
        %v831 = vadd.f32 %v815, 1e-05
        %v832 = vadd.f32 %v816, 1e-05
        %v833 = vadd.f32 %v817, 1e-05
        %v834 = vadd.f32 %v818, 1e-05
        %v835 = vrsqrt.pop %v819
        %v836 = vrsqrt.pop %v820
        %v837 = vrsqrt.pop %v821
        %v838 = vrsqrt.pop %v822
        %v839 = vrsqrt.pop %v823
        %v840 = vrsqrt.pop %v824
        %v841 = vrsqrt.pop %v825
        %v842 = vrsqrt.pop %v826
        %v843 = vrsqrt.pop %v827
        %v844 = vrsqrt.pop %v828
        %v845 = vrsqrt.pop %v829
        %v846 = vrsqrt.pop %v830
        %v847 = vrsqrt.pop %v831
        %v848 = vrsqrt.pop %v832
        %v849 = vrsqrt.pop %v833
        %v850 = vrsqrt.pop %v834
        %v851 = vmul.f32 %v716, %v835
        %v852 = vmul.f32 %v717, %v836
        %v853 = vmul.f32 %v718, %v837
        %v854 = vmul.f32 %v719, %v838
        %v855 = vmul.f32 %v720, %v839
        %v856 = vmul.f32 %v721, %v840
        %v857 = vmul.f32 %v722, %v841
        %v858 = vmul.f32 %v723, %v842
        %v859 = vmul.f32 %v724, %v843
        %v860 = vmul.f32 %v725, %v844
        %v861 = vmul.f32 %v726, %v845
        %v862 = vmul.f32 %v727, %v846
        %v863 = vmul.f32 %v728, %v847
        %v864 = vmul.f32 %v729, %v848
        %v865 = vmul.f32 %v730, %v849
        %v866 = vmul.f32 %v731, %v850
        %v867 = vld [vmem:[%s3] sm:$0x1]
        %v869 = vlaneseq
        %v870 = vshrl.u32 %v869, 7
        %v871 = vsub.s32 0, %v870
        %v872 = vrot.slane %v867, %v871
        %v874 = vmul.f32 %v851, %v872
        %v875 = vmul.f32 %v852, %v872
        %v876 = vmul.f32 %v853, %v872
        %v877 = vmul.f32 %v854, %v872
        %v878 = vmul.f32 %v855, %v872
        %v879 = vmul.f32 %v856, %v872
        %v880 = vmul.f32 %v857, %v872
        %v881 = vmul.f32 %v858, %v872
        %v882 = vmul.f32 %v859, %v872
        %v883 = vmul.f32 %v860, %v872
        %v884 = vmul.f32 %v861, %v872
        %v885 = vmul.f32 %v862, %v872
        %v886 = vmul.f32 %v863, %v872
        %v887 = vmul.f32 %v864, %v872
        %v888 = vmul.f32 %v865, %v872
        %v889 = vmul.f32 %v866, %v872
        %v890 = vld [vmem:[%s4] sm:$0x1]
        %v892 = vlaneseq
        %v893 = vshrl.u32 %v892, 7
        %v894 = vsub.s32 0, %v893
        %v895 = vrot.slane %v890, %v894
        %v897 = vadd.f32 %v874, %v895
        %v898 = vadd.f32 %v875, %v895
        %v899 = vadd.f32 %v876, %v895
        %v900 = vadd.f32 %v877, %v895
        %v901 = vadd.f32 %v878, %v895
        %v902 = vadd.f32 %v879, %v895
        %v903 = vadd.f32 %v880, %v895
        %v904 = vadd.f32 %v881, %v895
        %v905 = vadd.f32 %v882, %v895
        %v906 = vadd.f32 %v883, %v895
        %v907 = vadd.f32 %v884, %v895
        %v908 = vadd.f32 %v885, %v895
        %v909 = vadd.f32 %v886, %v895
        %v910 = vadd.f32 %v887, %v895
        %v911 = vadd.f32 %v888, %v895
        %v912 = vadd.f32 %v889, %v895
        %v913 = vpack.c.bf16 %v898, %v897
        %v914 = vpack.c.bf16 %v900, %v899
        %v915 = vpack.c.bf16 %v902, %v901
        %v916 = vpack.c.bf16 %v904, %v903
        %v917 = vpack.c.bf16 %v906, %v905
        %v918 = vpack.c.bf16 %v908, %v907
        %v919 = vpack.c.bf16 %v910, %v909
        %v920 = vpack.c.bf16 %v912, %v911
        %v921 = vld [vmem:[#allocation7] sm:$0xf]
        %v922 = vld [vmem:[#allocation7 + $0x4] sm:$0xf]
        %v923 = vld [vmem:[#allocation7 + $0x8] sm:$0xf]
        %v924 = vld [vmem:[#allocation7 + $0xc] sm:$0xf]
        %v925 = vld [vmem:[#allocation7 + $0x10] sm:$0xf]
        %v926 = vld [vmem:[#allocation7 + $0x14] sm:$0xf]
        %v927 = vld [vmem:[#allocation7 + $0x18] sm:$0xf]
        %v928 = vld [vmem:[#allocation7 + $0x1c] sm:$0xf]
        %v929 = vld [vmem:[#allocation7 + $0x20] sm:$0xf]
        %v930 = vld [vmem:[#allocation7 + $0x24] sm:$0xf]
        %v931 = vld [vmem:[#allocation7 + $0x28] sm:$0xf]
        %v932 = vld [vmem:[#allocation7 + $0x2c] sm:$0xf]
        %v933 = vld [vmem:[#allocation7 + $0x30] sm:$0xf]
        %v934 = vld [vmem:[#allocation7 + $0x34] sm:$0xf]
        %v935 = vld [vmem:[#allocation7 + $0x38] sm:$0xf]
        %v936 = vld [vmem:[#allocation7 + $0x3c] sm:$0xf]
        %v937 = vld [vmem:[%s6] sm:$0x1]
        %v939 = vlaneseq
        %v940 = vshrl.u32 %v939, 7
        %v941 = vsub.s32 0, %v940
        %v942 = vrot.slane %v937, %v941
        %v960 = vunpack.c.l.b16 %v921
        %v961 = vunpack.c.l.b16 %v922
        %v962 = vunpack.c.l.b16 %v923
        %v963 = vunpack.c.l.b16 %v924
        %v964 = vunpack.c.l.b16 %v925
        %v965 = vunpack.c.l.b16 %v926
        %v966 = vunpack.c.l.b16 %v927
        %v967 = vunpack.c.l.b16 %v928
        %v968 = vunpack.c.l.b16 %v929
        %v969 = vunpack.c.l.b16 %v930
        %v970 = vunpack.c.l.b16 %v931
        %v971 = vunpack.c.l.b16 %v932
        %v972 = vunpack.c.l.b16 %v933
        %v973 = vunpack.c.l.b16 %v934
        %v974 = vunpack.c.l.b16 %v935
        %v975 = vunpack.c.l.b16 %v936
        %v976 = vpack.c.b16 %v961, %v960
        %v977 = vpack.c.b16 %v963, %v962
        %v978 = vpack.c.b16 %v965, %v964
        %v979 = vpack.c.b16 %v967, %v966
        %v980 = vpack.c.b16 %v969, %v968
        %v981 = vpack.c.b16 %v971, %v970
        %v982 = vpack.c.b16 %v973, %v972
        %v983 = vpack.c.b16 %v975, %v974
        %992 = vmatprep.subr.bf16.mxu0 0
        %993 = vmatpush1.bf16.msra.mxu0 %v976
        %994 = vmatprep.subr.bf16.mxu0 0
        %995 = vmatpush1.bf16.msra.mxu0 %v977
        %996 = vmatprep.subr.bf16.mxu0 0
        %997 = vmatpush1.bf16.msra.mxu0 %v978
        %998 = vmatprep.subr.bf16.mxu0 0
        %999 = vmatpush1.bf16.msra.mxu0 %v979
        %1000 = vmatprep.subr.bf16.mxu0 0
        %1001 = vmatpush1.bf16.msra.mxu0 %v980
        %1002 = vmatprep.subr.bf16.mxu0 0
        %1003 = vmatpush1.bf16.msra.mxu0 %v981
        %1004 = vmatprep.subr.bf16.mxu0 0
        %1005 = vmatpush1.bf16.msra.mxu0 %v982
        %1006 = vmatprep.subr.bf16.mxu0 0
        %1007 = vmatpush1.bf16.msra.mxu0 %v983
        %1008 = vmatprep.subr.bf16.mxu0 0
        %1009 = vmatpush1.bf16.msra.mxu0 0
        %1010 = vmatprep.subr.bf16.mxu0 0
        %1011 = vmatpush1.bf16.msra.mxu0 0
        %1012 = vmatprep.subr.bf16.mxu0 0
        %1013 = vmatpush1.bf16.msra.mxu0 0
        %1014 = vmatprep.subr.bf16.mxu0 0
        %1015 = vmatpush1.bf16.msra.mxu0 0
        %1016 = vmatprep.subr.bf16.mxu0 0
        %1017 = vmatpush1.bf16.msra.mxu0 0
        %1018 = vmatprep.subr.bf16.mxu0 0
        %1019 = vmatpush1.bf16.msra.mxu0 0
        %1020 = vmatprep.subr.bf16.mxu0 0
        %1021 = vmatpush1.bf16.msra.mxu0 0
        %1022 = vmatprep.subr.bf16.mxu0 0
        %1023 = vmatpush1.bf16.msra.mxu0 0
        %1024 = vmatprep.mubr.bf16.mxu0 0
        %1025 = vmatmul.mubr.bf16.gmra.mrb[0].mxu0 %v913
        %v1026 = vpop.f32.mrb[0].mxu0
        %v1027 = vadd.f32 %v942, %v1026
        %v1028 = vpop.f32.mrb[0].mxu0
        %v1029 = vpop.f32.mrb[0].mxu0
        %v1030 = vadd.f32 %v942, %v1029
        %v1031 = vpop.f32.mrb[0].mxu0
        %1032 = vmatprep.mubr.bf16.mxu0 0
        %1033 = vmatmul.mubr.bf16.gmra.mrb[0].mxu0 %v914
        %v1034 = vpop.f32.mrb[0].mxu0
        %v1035 = vadd.f32 %v942, %v1034
        %v1036 = vpop.f32.mrb[0].mxu0
        %v1037 = vpop.f32.mrb[0].mxu0
        %v1038 = vadd.f32 %v942, %v1037
        %v1039 = vpop.f32.mrb[0].mxu0
        %1040 = vmatprep.mubr.bf16.mxu0 0
        %1041 = vmatmul.mubr.bf16.gmra.mrb[0].mxu0 %v915
        %v1042 = vpop.f32.mrb[0].mxu0
        %v1043 = vadd.f32 %v942, %v1042
        %v1044 = vpop.f32.mrb[0].mxu0
        %v1045 = vpop.f32.mrb[0].mxu0
        %v1046 = vadd.f32 %v942, %v1045
        %v1047 = vpop.f32.mrb[0].mxu0
        %1048 = vmatprep.mubr.bf16.mxu0 0
        %1049 = vmatmul.mubr.bf16.gmra.mrb[0].mxu0 %v916
        %v1050 = vpop.f32.mrb[0].mxu0
        %v1051 = vadd.f32 %v942, %v1050
        %v1052 = vpop.f32.mrb[0].mxu0
        %v1053 = vpop.f32.mrb[0].mxu0
        %v1054 = vadd.f32 %v942, %v1053
        %v1055 = vpop.f32.mrb[0].mxu0
        %1056 = vmatprep.mubr.bf16.mxu0 0
        %1057 = vmatmul.mubr.bf16.gmra.mrb[0].mxu0 %v917
        %v1058 = vpop.f32.mrb[0].mxu0
        %v1059 = vadd.f32 %v942, %v1058
        %v1060 = vpop.f32.mrb[0].mxu0
        %v1061 = vpop.f32.mrb[0].mxu0
        %v1062 = vadd.f32 %v942, %v1061
        %v1063 = vpop.f32.mrb[0].mxu0
        %1064 = vmatprep.mubr.bf16.mxu0 0
        %1065 = vmatmul.mubr.bf16.gmra.mrb[0].mxu0 %v918
        %v1066 = vpop.f32.mrb[0].mxu0
        %v1067 = vadd.f32 %v942, %v1066
        %v1068 = vpop.f32.mrb[0].mxu0
        %v1069 = vpop.f32.mrb[0].mxu0
        %v1070 = vadd.f32 %v942, %v1069
        %v1071 = vpop.f32.mrb[0].mxu0
        %1072 = vmatprep.mubr.bf16.mxu0 0
        %1073 = vmatmul.mubr.bf16.gmra.mrb[0].mxu0 %v919
        %v1074 = vpop.f32.mrb[0].mxu0
        %v1075 = vadd.f32 %v942, %v1074
        %v1076 = vpop.f32.mrb[0].mxu0
        %v1077 = vpop.f32.mrb[0].mxu0
        %v1078 = vadd.f32 %v942, %v1077
        %v1079 = vpop.f32.mrb[0].mxu0
        %1080 = vmatprep.mubr.bf16.mxu0 0
        %1081 = vmatmul.mubr.bf16.gmra.mrb[0].mxu0 %v920
        %v1082 = vpop.f32.mrb[0].mxu0
        %v1083 = vadd.f32 %v942, %v1082
        %v1084 = vpop.f32.mrb[0].mxu0
        %v1085 = vpop.f32.mrb[0].mxu0
        %v1086 = vadd.f32 %v942, %v1085
        %v1087 = vpop.f32.mrb[0].mxu0
        %1088 = vdwg.mxu0
        %v1089 = vpack.c.bf16 %v1030, %v1027
        %v1090 = vpack.c.bf16 %v1038, %v1035
        %v1091 = vpack.c.bf16 %v1046, %v1043
        %v1092 = vpack.c.bf16 %v1054, %v1051
        %v1093 = vpack.c.bf16 %v1062, %v1059
        %v1094 = vpack.c.bf16 %v1070, %v1067
        %v1095 = vpack.c.bf16 %v1078, %v1075
        %v1096 = vpack.c.bf16 %v1086, %v1083
        %v1105 = vunpack.c.l.b16 %v1089
        %v1106 = vunpack.c.h.b16 %v1089
        %v1107 = vunpack.c.l.b16 %v1090
        %v1108 = vunpack.c.h.b16 %v1090
        %v1109 = vunpack.c.l.b16 %v1091
        %v1110 = vunpack.c.h.b16 %v1091
        %v1111 = vunpack.c.l.b16 %v1092
        %v1112 = vunpack.c.h.b16 %v1092
        %v1113 = vunpack.c.l.b16 %v1093
        %v1114 = vunpack.c.h.b16 %v1093
        %v1115 = vunpack.c.l.b16 %v1094
        %v1116 = vunpack.c.h.b16 %v1094
        %v1117 = vunpack.c.l.b16 %v1095
        %v1118 = vunpack.c.h.b16 %v1095
        %v1119 = vunpack.c.l.b16 %v1096
        %v1120 = vunpack.c.h.b16 %v1096
        %v1121 = vpack.c.b16 %v1105, %v1105
        %v1122 = vpack.c.b16 %v1106, %v1106
        %v1123 = vpack.c.b16 %v1107, %v1107
        %v1124 = vpack.c.b16 %v1108, %v1108
        %v1125 = vpack.c.b16 %v1109, %v1109
        %v1126 = vpack.c.b16 %v1110, %v1110
        %v1127 = vpack.c.b16 %v1111, %v1111
        %v1128 = vpack.c.b16 %v1112, %v1112
        %v1129 = vpack.c.b16 %v1113, %v1113
        %v1130 = vpack.c.b16 %v1114, %v1114
        %v1131 = vpack.c.b16 %v1115, %v1115
        %v1132 = vpack.c.b16 %v1116, %v1116
        %v1133 = vpack.c.b16 %v1117, %v1117
        %v1134 = vpack.c.b16 %v1118, %v1118
        %v1135 = vpack.c.b16 %v1119, %v1119
        %v1136 = vpack.c.b16 %v1120, %v1120
        %1153 = vst [vmem:[%s352] sm:$0xf] %v1121
        %1154 = vst [vmem:[%s352 + $0x4] sm:$0xf] %v1122
        %1155 = vst [vmem:[%s352 + $0x8] sm:$0xf] %v1123
        %1156 = vst [vmem:[%s352 + $0xc] sm:$0xf] %v1124
        %1157 = vst [vmem:[%s352 + $0x10] sm:$0xf] %v1125
        %1158 = vst [vmem:[%s352 + $0x14] sm:$0xf] %v1126
        %1159 = vst [vmem:[%s352 + $0x18] sm:$0xf] %v1127
        %1160 = vst [vmem:[%s352 + $0x1c] sm:$0xf] %v1128
        %1161 = vst [vmem:[%s352 + $0x20] sm:$0xf] %v1129
        %1162 = vst [vmem:[%s352 + $0x24] sm:$0xf] %v1130
        %1163 = vst [vmem:[%s352 + $0x28] sm:$0xf] %v1131
        %1164 = vst [vmem:[%s352 + $0x2c] sm:$0xf] %v1132
        %1165 = vst [vmem:[%s352 + $0x30] sm:$0xf] %v1133
        %1166 = vst [vmem:[%s352 + $0x34] sm:$0xf] %v1134
        %1167 = vst [vmem:[%s352 + $0x38] sm:$0xf] %v1135
        %1168 = vst [vmem:[%s352 + $0x3c] sm:$0xf] %v1136
        %s1169 = sand.u32 %s207, 1
        %s1170 = scalar_lea.sflag [#allocation4], %s1169
        %s1171 = sand.u32 %s207, 1
        %s1172 = smul.addr %s1171, 64
        %s1173 = scalar_lea.vmem [#allocation8], %s1172
        // Predicated region
        $region65: #{tpu_custom_call.1} parent=51 // pred_check
          %p1174 = pneg %p217
        $region66: #{tpu_custom_call.1} parent=51 // pred_check_branch
          %1176 = sbr.rel (%p1174) target = $region68
        $region67: #{tpu_custom_call.1} parent=51 // pred_region
          %s1177 = smul.u32 16, %s26
          %s1179 = ssub.s32 1024, 1024
          %1180 = vsyncadd %s1170, %s1179
          %s1181 = smul.addr %s1177, 64
          %s1182 = scalar_lea.hbm %s8, %s1181
          %s1183 = sshll.u32 %s1173, 4
          %s1184 = int_to_ptr.vmem [resolvable:$true] %s1183
          %1189 = dma.vmem_to_hbm [thread:$0]  %s1184, 1024, %s1182, %s1170, 64, 64, 4
        $region68: #{tpu_custom_call.1} parent=51 // pred_fallthru
          _
      $region52: #{tpu_custom_call.1} parent=5 // pred_fallthru
        _
      %p1190 = scmp.le.s32.totalorder 2, %s21
      // Predicated region
      $region69: #{tpu_custom_call.1} parent=5 // pred_check
        %p1191 = pneg %p1190
      $region70: #{tpu_custom_call.1} parent=5 // pred_check_branch
        %1193 = sbr.rel (%p1191) target = $region72
      $region71: #{tpu_custom_call.1} parent=5 // pred_region
        %s1194 = ssub.s32 %s21, 2
        // Predicated region
        $region73: #{tpu_custom_call.1} parent=71 // pred_check
          %p1195 = pneg %p223
        $region74: #{tpu_custom_call.1} parent=71 // pred_check_branch
          %1197 = sbr.rel (%p1195) target = $region76
        $region75: #{tpu_custom_call.1} parent=71 // pred_region
          %s1198 = sand.u32 %s208, 1
          %s1199 = scalar_lea.sflag [#allocation4], %s1198
          %s1200 = sand.u32 %s208, 1
          %s1201 = smul.addr %s1200, 64
          %s1202 = scalar_lea.vmem [#allocation8], %s1201
          %1203 = dma.done %s1199, 1024
        $region76: #{tpu_custom_call.1} parent=71 // pred_fallthru
          _
      $region72: #{tpu_custom_call.1} parent=5 // pred_fallthru
        _
    $region6: #{tpu_custom_call.1} parent=1 // loop_footer
      %s25 = sadd.s32 1, %s21
    $region7: #{tpu_custom_call.1} parent=1 // loop_footer_branch
      %20 = sbr.rel target = $region3
    $region8: #{tpu_custom_call.1} parent=1 // loop_exit
      _
    %1204 = vsyncpa [#allocation3], 1
    %s1205 = scalar_lea.sflag [#allocation3], 1
    %1206 = vsyncpa %s1205, 1
    %1207 = vsyncpa [#allocation6], 1
    %1208 = vsyncpa [#allocation4], 1
    %s1209 = scalar_lea.sflag [#allocation4], 1
    %1210 = vsyncpa %s1209, 1

</llo_original>
